<compile_context>
chip_gen: v7x
topology: tpu7x:2x2x1
jax: 0.10.0
libtpu: 0.0.40
codegen_flags: <defaults>
</compile_context>

<pallas_src>
import functools

import jax
import jax.numpy as jnp
from jax.experimental import pallas as pl
from jax.experimental.pallas import tpu as pltpu


# --------------------------------------------------------------------------- #
# Kernels
# --------------------------------------------------------------------------- #
def lstm_seq_kernel(emb_ref, h0_ref, c0_ref, w_ih_ref, w_hh_ref, b_ref,
                    hseq_ref, h_out_ref, c_out_ref):
    """Single-layer LSTM over T timesteps (batch_first semantics).

    emb_ref : (T*B, E)  time-major-flattened embedded inputs (row = t*B + b)
    h0/c0   : (B, H)    previous hidden / cell state for this layer
    w_ih    : (E, 4H)   pre-transposed, bf16
    w_hh    : (H, 4H)   pre-transposed, bf16
    b       : (1, 4H)   b_ih + b_hh pre-summed, f32
    hseq    : (T, B, H) per-step hidden outputs (f32)
    """
    T, B, H = hseq_ref.shape
    cdt = w_ih_ref.dtype

    # Input projection for ALL timesteps in one MXU matmul (no recurrence dep).
    gx = jnp.dot(emb_ref[...].astype(cdt), w_ih_ref[...],
                 preferred_element_type=jnp.float32) + b_ref[...]      # (T*B, 4H)

    h = h0_ref[...]
    c = c0_ref[...]
    # T is the (small, static) teacher-forcing target length: unrolled loop.
    for t in range(T):
        gates = gx[t * B:(t + 1) * B, :] + jnp.dot(
            h.astype(cdt), w_hh_ref[...], preferred_element_type=jnp.float32)
        # PyTorch LSTM gate order: i, f, g, o  (slices are lane-aligned when H%128==0)
        i_g = jax.nn.sigmoid(gates[:, 0 * H:1 * H])
        f_g = jax.nn.sigmoid(gates[:, 1 * H:2 * H])
        g_g = jnp.tanh(gates[:, 2 * H:3 * H])
        o_g = jax.nn.sigmoid(gates[:, 3 * H:4 * H])
        c = f_g * c + i_g * g_g
        h = o_g * jnp.tanh(c)
        hseq_ref[t] = h
    h_out_ref[...] = h
    c_out_ref[...] = c


def dense_kernel(hseq_ref, w_ref, b_ref, out_ref):
    """One vocab tile of the classifier: (B*T, H) @ (H, TN) + b."""
    out_ref[...] = (jnp.dot(hseq_ref[...].astype(w_ref.dtype), w_ref[...],
                            preferred_element_type=jnp.float32)
                    + b_ref[...]).astype(out_ref.dtype)


# --------------------------------------------------------------------------- #
# One-time parameter prep (hoisted out of the per-step forward)
# --------------------------------------------------------------------------- #
def _pick_vocab_tile(vocab_size, hidden_dim, weight_bytes,
                     tile_budget_bytes=8 * 1024 * 1024):
    """Largest 128-multiple tile that divides V with a modest double-buffered tile."""
    if vocab_size % 128 != 0:
        # TODO(synk): pad vocab to a multiple of 128 for lane-dense logits stores.
        return vocab_size
    max_tn = max(128, (tile_budget_bytes // (2 * hidden_dim * weight_bytes))
                 // 128 * 128)
    tn = min(max_tn, vocab_size)
    while vocab_size % tn != 0:
        tn -= 128
    return tn


def init_torch_params(key, vocab_size, embed_dim, hidden_dim, num_layers=1):
    """Random parameters in the PyTorch module's native layout."""
    keys = iter(jax.random.split(key, 3 + 4 * num_layers))
    s = 0.1
    p = {
        "embedding.weight": jax.random.normal(next(keys), (vocab_size, embed_dim),
                                              jnp.float32) * s,
        "dense.weight": jax.random.normal(next(keys), (vocab_size, hidden_dim),
                                          jnp.float32) * s,
        "dense.bias": jax.random.normal(next(keys), (vocab_size,), jnp.float32) * s,
    }
    for l in range(num_layers):
        in_dim = embed_dim if l == 0 else hidden_dim
        p[f"rnn.weight_ih_l{l}"] = jax.random.normal(
            next(keys), (4 * hidden_dim, in_dim), jnp.float32) * s
        p[f"rnn.weight_hh_l{l}"] = jax.random.normal(
            next(keys), (4 * hidden_dim, hidden_dim), jnp.float32) * s
        p[f"rnn.bias_ih_l{l}"] = jax.random.normal(
            next(keys), (4 * hidden_dim,), jnp.float32) * s
        p[f"rnn.bias_hh_l{l}"] = jax.random.normal(
            next(keys), (4 * hidden_dim,), jnp.float32) * s
    return p


def prepare_params(torch_params, num_layers, hidden_dim,
                   weight_dtype=jnp.bfloat16, vocab_tile=None):
    """Load-time prep: transposes, bias pre-sums and bf16 casts happen ONCE here,
    so the per-token forward never re-materializes / re-transposes weights."""
    vocab_size, _ = torch_params["embedding.weight"].shape
    layers = []
    for l in range(num_layers):
        layers.append({
            "w_ih": torch_params[f"rnn.weight_ih_l{l}"].T.astype(weight_dtype),
            "w_hh": torch_params[f"rnn.weight_hh_l{l}"].T.astype(weight_dtype),
            "b": (torch_params[f"rnn.bias_ih_l{l}"]
                  + torch_params[f"rnn.bias_hh_l{l}"]).reshape(1, -1)
                 .astype(jnp.float32),
        })
    if vocab_tile is None:
        vocab_tile = _pick_vocab_tile(vocab_size, hidden_dim,
                                      jnp.dtype(weight_dtype).itemsize)
    assert vocab_size % vocab_tile == 0
    return {
        "embedding": torch_params["embedding.weight"],                  # (V, E) f32
        "layers": layers,
        "w_dense": torch_params["dense.weight"].T.astype(weight_dtype),  # (H, V)
        "b_dense": torch_params["dense.bias"].reshape(1, -1).astype(jnp.float32),
        "vocab_tile": int(vocab_tile),
    }


# --------------------------------------------------------------------------- #
# Forward pass (mirrors Decoder.forward, LSTM path, eval-mode dropout)
# --------------------------------------------------------------------------- #
def decoder_forward(x_ids, state, prep):
    """x_ids: (B, T) int32;  state: (h, c) each (num_layers, B, H).
    Returns logits (B, T, V) and updated (h, c)."""
    h0, c0 = state
    B, T = x_ids.shape
    H = h0.shape[-1]
    V = prep["embedding"].shape[0]

    # Embedding gather + dropout(eval)=identity.  Time-major so the LSTM kernel
    # reads contiguous row blocks per timestep.
    emb = jnp.take(prep["embedding"], x_ids.T, axis=0)        # (T, B, E)
    layer_in = emb.reshape(T * B, -1)

    vmem = pl.BlockSpec(memory_space=pltpu.MemorySpace.VMEM)
    h_finals, c_finals = [], []
    hseq_tm = None
    for l, layer in enumerate(prep["layers"]):
        hseq_tm, h_f, c_f = pl.pallas_call(
            lstm_seq_kernel,
            out_shape=(jax.ShapeDtypeStruct((T, B, H), jnp.float32),
                       jax.ShapeDtypeStruct((B, H), jnp.float32),
                       jax.ShapeDtypeStruct((B, H), jnp.float32)),
            in_specs=[vmem] * 6,
            out_specs=(vmem, vmem, vmem),
        )(layer_in, h0[l], c0[l], layer["w_ih"], layer["w_hh"], layer["b"])
        h_finals.append(h_f)
        c_finals.append(c_f)
        # Dropout between stacked layers = identity (eval mode).
        layer_in = hseq_tm.reshape(T * B, H)

    # Classifier tiled over the vocab: the (H, V) weight is streamed tile-by-tile
    # (double-buffered by BlockSpec) instead of being required to fit in VMEM.
    hseq_bt = jnp.swapaxes(hseq_tm, 0, 1).reshape(B * T, H)   # batch-major rows
    TN = prep["vocab_tile"]
    logits_flat = pl.pallas_call(
        dense_kernel,
        out_shape=jax.ShapeDtypeStruct((B * T, V), jnp.float32),
        grid=(pl.cdiv(V, TN),),
        in_specs=[pl.BlockSpec((B * T, H), lambda j: (0, 0)),   # resident activations
                  pl.BlockSpec((H, TN), lambda j: (0, j)),      # streamed weight tile
                  pl.BlockSpec((1, TN), lambda j: (0, j))],     # bias tile
        out_specs=pl.BlockSpec((B * T, TN), lambda j: (0, j)),
        compiler_params=pltpu.CompilerParams(
            dimension_semantics=("parallel",),      # shards vocab tiles across TCs on v7x
            vmem_limit_bytes=32 * 1024 * 1024,      # raise further for large H*TN tiles
        ),
    )(hseq_bt, prep["w_dense"], prep["b_dense"])
    logits = logits_flat.reshape(B, T, V)

    h_new = jnp.stack(h_finals, axis=0)
    c_new = jnp.stack(c_finals, axis=0)
    # TODO(synk): GRU / bidirectional branches of the module are not implemented.
    return logits, (h_new, c_new)


# --------------------------------------------------------------------------- #
# Demo
# --------------------------------------------------------------------------- #
if __name__ == "__main__":
    B, T = 2, 4                         # batch, target sequence length  (B*T = 8 sublanes)
    VOCAB, EMBED, HIDDEN = 512, 64, 128  # lane-aligned H and V
    NUM_LAYERS = 1

    key = jax.random.PRNGKey(0)
    kp, kx, kh, kc = jax.random.split(key, 4)

    torch_params = init_torch_params(kp, VOCAB, EMBED, HIDDEN, NUM_LAYERS)
    # One-time prep (transposes / bias sums / bf16 cast / tile choice) -- NOT per step.
    prep = prepare_params(torch_params, NUM_LAYERS, HIDDEN, vocab_tile=128)

    x = jax.random.randint(kx, (B, T), 0, VOCAB, dtype=jnp.int32)
    h0 = jax.random.normal(kh, (NUM_LAYERS, B, HIDDEN), jnp.float32)
    c0 = jax.random.normal(kc, (NUM_LAYERS, B, HIDDEN), jnp.float32)

    step = jax.jit(functools.partial(decoder_forward, prep=prep))
    logits, (h_new, c_new) = step(x, (h0, c0))
    jax.block_until_ready((logits, h_new, c_new))

    assert logits.shape == (B, T, VOCAB)
    assert h_new.shape == (NUM_LAYERS, B, HIDDEN)
    assert c_new.shape == (NUM_LAYERS, B, HIDDEN)
    assert bool(jnp.all(jnp.isfinite(logits)))
    print("KERNEL_OK")
</pallas_src>

<mosaic_0001>
module attributes {stable_mosaic.version = 11 : i64} {
  func.func @dense_kernel(%arg0: i32, %arg1: memref<8x128xf32, #tpu.memory_space<vmem>>, %arg2: memref<128x128xbf16, #tpu.memory_space<vmem>>, %arg3: memref<1x128xf32, #tpu.memory_space<vmem>>, %arg4: memref<8x128xf32, #tpu.memory_space<vmem>>) attributes {dimension_semantics = [#tpu.dimension_semantics<parallel>], iteration_bounds = array<i64: 4>, scalar_prefetch = 0 : i64, scratch_operands = 0 : i64, tpu.core_type = #tpu.core_type<tc>, window_params = [{pipeline_mode = #tpu.pipeline_mode<synchronous>, transform_indices = @transform_0, window_bounds = array<i64: 8, 128>}, {transform_indices = @transform_1, window_bounds = array<i64: 128, 128>}, {transform_indices = @transform_2, window_bounds = array<i64: 1, 128>}, {transform_indices = @transform_3, window_bounds = array<i64: 8, 128>}]} {
    %c0 = arith.constant 0 : index
    %c0_0 = arith.constant 0 : index
    %0 = vector.load %arg1[%c0, %c0_0] : memref<8x128xf32, #tpu.memory_space<vmem>>, vector<8x128xf32>
    %1 = arith.truncf %0 : vector<8x128xf32> to vector<8x128xbf16>
    %c0_1 = arith.constant 0 : index
    %c0_2 = arith.constant 0 : index
    %2 = vector.load %arg2[%c0_1, %c0_2] : memref<128x128xbf16, #tpu.memory_space<vmem>>, vector<128x128xbf16>
    %cst = arith.constant dense<0.000000e+00> : vector<8x128xf32>
    %3 = tpu.matmul %1, %2, %cst {dimension_numbers = #tpu.dot_dimension_numbers<[1], [0], [0], [1], [0, 0, 1, 1], [], []>} : vector<8x128xbf16>, vector<128x128xbf16>, vector<8x128xf32> -> vector<8x128xf32>
    %c0_3 = arith.constant 0 : index
    %c0_4 = arith.constant 0 : index
    %4 = vector.load %arg3[%c0_3, %c0_4] : memref<1x128xf32, #tpu.memory_space<vmem>>, vector<1x128xf32>
    %5 = vector.broadcast %4 : vector<1x128xf32> to vector<8x128xf32>
    %6 = arith.addf %3, %5 : vector<8x128xf32>
    %c0_5 = arith.constant 0 : index
    %c0_6 = arith.constant 0 : index
    %7 = vector.load %arg4[%c0_5, %c0_6] : memref<8x128xf32, #tpu.memory_space<vmem>>, vector<8x128xf32>
    tpu.vector_store %arg4[%c0_5, %c0_6], %6 {strides = array<i32>} : memref<8x128xf32, #tpu.memory_space<vmem>>, vector<8x128xf32>,
    return
  }
  func.func @transform_0(%arg0: i32) -> (i32, i32) {
    %c0_i32 = arith.constant 0 : i32
    %c0_i32_0 = arith.constant 0 : i32
    %c0_i32_1 = arith.constant 0 : i32
    return %c0_i32, %c0_i32_0 : i32, i32
  }
  func.func @transform_1(%arg0: i32) -> (i32, i32) {
    %c0_i32 = arith.constant 0 : i32
    %c0_i32_0 = arith.constant 0 : i32
    return %c0_i32, %arg0 : i32, i32
  }
  func.func @transform_2(%arg0: i32) -> (i32, i32) {
    %c0_i32 = arith.constant 0 : i32
    %c0_i32_0 = arith.constant 0 : i32
    return %c0_i32, %arg0 : i32, i32
  }
  func.func @transform_3(%arg0: i32) -> (i32, i32) {
    %c0_i32 = arith.constant 0 : i32
    %c0_i32_0 = arith.constant 0 : i32
    return %c0_i32, %arg0 : i32, i32
  }
}

module attributes {stable_mosaic.version = 11 : i64} {
  func.func @lstm_seq_kernel(%arg0: memref<8x64xf32, #tpu.memory_space<vmem>>, %arg1: memref<2x128xf32, #tpu.memory_space<vmem>>, %arg2: memref<2x128xf32, #tpu.memory_space<vmem>>, %arg3: memref<64x512xbf16, #tpu.memory_space<vmem>>, %arg4: memref<128x512xbf16, #tpu.memory_space<vmem>>, %arg5: memref<1x512xf32, #tpu.memory_space<vmem>>, %arg6: memref<4x2x128xf32, #tpu.memory_space<vmem>>, %arg7: memref<2x128xf32, #tpu.memory_space<vmem>>, %arg8: memref<2x128xf32, #tpu.memory_space<vmem>>) attributes {dimension_semantics = [], scalar_prefetch = 0 : i64, scratch_operands = 0 : i64, tpu.core_type = #tpu.core_type<tc>} {
    %c0 = arith.constant 0 : index
    %c0_0 = arith.constant 0 : index
    %0 = vector.load %arg0[%c0, %c0_0] : memref<8x64xf32, #tpu.memory_space<vmem>>, vector<8x64xf32>
    %1 = arith.truncf %0 : vector<8x64xf32> to vector<8x64xbf16>
    %c0_1 = arith.constant 0 : index
    %c0_2 = arith.constant 0 : index
    %2 = vector.load %arg3[%c0_1, %c0_2] : memref<64x512xbf16, #tpu.memory_space<vmem>>, vector<64x512xbf16>
    %cst = arith.constant dense<0.000000e+00> : vector<8x512xf32>
    %3 = tpu.matmul %1, %2, %cst {dimension_numbers = #tpu.dot_dimension_numbers<[1], [0], [0], [1], [0, 0, 1, 1], [], []>} : vector<8x64xbf16>, vector<64x512xbf16>, vector<8x512xf32> -> vector<8x512xf32>
    %c0_3 = arith.constant 0 : index
    %c0_4 = arith.constant 0 : index
    %4 = vector.load %arg5[%c0_3, %c0_4] : memref<1x512xf32, #tpu.memory_space<vmem>>, vector<1x512xf32>
    %5 = vector.broadcast %4 : vector<1x512xf32> to vector<8x512xf32>
    %6 = arith.addf %3, %5 : vector<8x512xf32>
    %c0_5 = arith.constant 0 : index
    %c0_6 = arith.constant 0 : index
    %7 = vector.load %arg1[%c0_5, %c0_6] : memref<2x128xf32, #tpu.memory_space<vmem>>, vector<2x128xf32>
    %c0_7 = arith.constant 0 : index
    %c0_8 = arith.constant 0 : index
    %8 = vector.load %arg2[%c0_7, %c0_8] : memref<2x128xf32, #tpu.memory_space<vmem>>, vector<2x128xf32>
    %9 = vector.extract_strided_slice %6 {offsets = [0, 0], sizes = [2, 512], strides = [1, 1]} : vector<8x512xf32> to vector<2x512xf32>
    %10 = arith.truncf %7 : vector<2x128xf32> to vector<2x128xbf16>
    %c0_9 = arith.constant 0 : index
    %c0_10 = arith.constant 0 : index
    %11 = vector.load %arg4[%c0_9, %c0_10] : memref<128x512xbf16, #tpu.memory_space<vmem>>, vector<128x512xbf16>
    %cst_11 = arith.constant dense<0.000000e+00> : vector<2x512xf32>
    %12 = tpu.matmul %10, %11, %cst_11 {dimension_numbers = #tpu.dot_dimension_numbers<[1], [0], [0], [1], [0, 0, 1, 1], [], []>} : vector<2x128xbf16>, vector<128x512xbf16>, vector<2x512xf32> -> vector<2x512xf32>
    %13 = arith.addf %9, %12 : vector<2x512xf32>
    %14 = vector.extract_strided_slice %13 {offsets = [0, 0], sizes = [2, 128], strides = [1, 1]} : vector<2x512xf32> to vector<2x128xf32>
    %15 = arith.negf %14 : vector<2x128xf32>
    %16 = math.exp %15 : vector<2x128xf32>
    %cst_12 = arith.constant 1.000000e+00 : f32
    %17 = vector.broadcast %cst_12 : f32 to vector<2x128xf32>
    %18 = arith.addf %17, %16 : vector<2x128xf32>
    %19 = arith.divf %17, %18 : vector<2x128xf32>
    %20 = vector.extract_strided_slice %13 {offsets = [0, 128], sizes = [2, 128], strides = [1, 1]} : vector<2x512xf32> to vector<2x128xf32>
    %21 = arith.negf %20 : vector<2x128xf32>
    %22 = math.exp %21 : vector<2x128xf32>
    %cst_13 = arith.constant 1.000000e+00 : f32
    %23 = vector.broadcast %cst_13 : f32 to vector<2x128xf32>
    %24 = arith.addf %23, %22 : vector<2x128xf32>
    %25 = arith.divf %23, %24 : vector<2x128xf32>
    %26 = vector.extract_strided_slice %13 {offsets = [0, 256], sizes = [2, 128], strides = [1, 1]} : vector<2x512xf32> to vector<2x128xf32>
    %27 = math.tanh %26 : vector<2x128xf32>
    %28 = vector.extract_strided_slice %13 {offsets = [0, 384], sizes = [2, 128], strides = [1, 1]} : vector<2x512xf32> to vector<2x128xf32>
    %29 = arith.negf %28 : vector<2x128xf32>
    %30 = math.exp %29 : vector<2x128xf32>
    %cst_14 = arith.constant 1.000000e+00 : f32
    %31 = vector.broadcast %cst_14 : f32 to vector<2x128xf32>
    %32 = arith.addf %31, %30 : vector<2x128xf32>
    %33 = arith.divf %31, %32 : vector<2x128xf32>
    %34 = arith.mulf %25, %8 : vector<2x128xf32>
    %35 = arith.mulf %19, %27 : vector<2x128xf32>
    %36 = arith.addf %34, %35 : vector<2x128xf32>
    %37 = math.tanh %36 : vector<2x128xf32>
    %38 = arith.mulf %33, %37 : vector<2x128xf32>
    %c0_15 = arith.constant 0 : index
    %c0_16 = arith.constant 0 : index
    %c0_17 = arith.constant 0 : index
    %39 = vector.load %arg6[%c0_15, %c0_16, %c0_17] : memref<4x2x128xf32, #tpu.memory_space<vmem>>, vector<1x2x128xf32>
    %40 = vector.shape_cast %39 : vector<1x2x128xf32> to vector<2x128xf32>
    %41 = vector.shape_cast %38 : vector<2x128xf32> to vector<1x2x128xf32>
    tpu.vector_store %arg6[%c0_15, %c0_16, %c0_17], %41 {strides = array<i32>} : memref<4x2x128xf32, #tpu.memory_space<vmem>>, vector<1x2x128xf32>,
    %42 = vector.extract_strided_slice %6 {offsets = [2, 0], sizes = [2, 512], strides = [1, 1]} : vector<8x512xf32> to vector<2x512xf32>
    %43 = arith.truncf %38 : vector<2x128xf32> to vector<2x128xbf16>
    %c0_18 = arith.constant 0 : index
    %c0_19 = arith.constant 0 : index
    %44 = vector.load %arg4[%c0_18, %c0_19] : memref<128x512xbf16, #tpu.memory_space<vmem>>, vector<128x512xbf16>
    %cst_20 = arith.constant dense<0.000000e+00> : vector<2x512xf32>
    %45 = tpu.matmul %43, %44, %cst_20 {dimension_numbers = #tpu.dot_dimension_numbers<[1], [0], [0], [1], [0, 0, 1, 1], [], []>} : vector<2x128xbf16>, vector<128x512xbf16>, vector<2x512xf32> -> vector<2x512xf32>
    %46 = arith.addf %42, %45 : vector<2x512xf32>
    %47 = vector.extract_strided_slice %46 {offsets = [0, 0], sizes = [2, 128], strides = [1, 1]} : vector<2x512xf32> to vector<2x128xf32>
    %48 = arith.negf %47 : vector<2x128xf32>
    %49 = math.exp %48 : vector<2x128xf32>
    %cst_21 = arith.constant 1.000000e+00 : f32
    %50 = vector.broadcast %cst_21 : f32 to vector<2x128xf32>
    %51 = arith.addf %50, %49 : vector<2x128xf32>
    %52 = arith.divf %50, %51 : vector<2x128xf32>
    %53 = vector.extract_strided_slice %46 {offsets = [0, 128], sizes = [2, 128], strides = [1, 1]} : vector<2x512xf32> to vector<2x128xf32>
    %54 = arith.negf %53 : vector<2x128xf32>
    %55 = math.exp %54 : vector<2x128xf32>
    %cst_22 = arith.constant 1.000000e+00 : f32
    %56 = vector.broadcast %cst_22 : f32 to vector<2x128xf32>
    %57 = arith.addf %56, %55 : vector<2x128xf32>
    %58 = arith.divf %56, %57 : vector<2x128xf32>
    %59 = vector.extract_strided_slice %46 {offsets = [0, 256], sizes = [2, 128], strides = [1, 1]} : vector<2x512xf32> to vector<2x128xf32>
    %60 = math.tanh %59 : vector<2x128xf32>
    %61 = vector.extract_strided_slice %46 {offsets = [0, 384], sizes = [2, 128], strides = [1, 1]} : vector<2x512xf32> to vector<2x128xf32>
    %62 = arith.negf %61 : vector<2x128xf32>
    %63 = math.exp %62 : vector<2x128xf32>
    %cst_23 = arith.constant 1.000000e+00 : f32
    %64 = vector.broadcast %cst_23 : f32 to vector<2x128xf32>
    %65 = arith.addf %64, %63 : vector<2x128xf32>
    %66 = arith.divf %64, %65 : vector<2x128xf32>
    %67 = arith.mulf %58, %36 : vector<2x128xf32>
    %68 = arith.mulf %52, %60 : vector<2x128xf32>
    %69 = arith.addf %67, %68 : vector<2x128xf32>
    %70 = math.tanh %69 : vector<2x128xf32>
    %71 = arith.mulf %66, %70 : vector<2x128xf32>
    %c1 = arith.constant 1 : index
    %c0_24 = arith.constant 0 : index
    %c0_25 = arith.constant 0 : index
    %72 = vector.load %arg6[%c1, %c0_24, %c0_25] : memref<4x2x128xf32, #tpu.memory_space<vmem>>, vector<1x2x128xf32>
    %73 = vector.shape_cast %72 : vector<1x2x128xf32> to vector<2x128xf32>
    %74 = vector.shape_cast %71 : vector<2x128xf32> to vector<1x2x128xf32>
    tpu.vector_store %arg6[%c1, %c0_24, %c0_25], %74 {strides = array<i32>} : memref<4x2x128xf32, #tpu.memory_space<vmem>>, vector<1x2x128xf32>,
    %75 = vector.extract_strided_slice %6 {offsets = [4, 0], sizes = [2, 512], strides = [1, 1]} : vector<8x512xf32> to vector<2x512xf32>
    %76 = arith.truncf %71 : vector<2x128xf32> to vector<2x128xbf16>
    %c0_26 = arith.constant 0 : index
    %c0_27 = arith.constant 0 : index
    %77 = vector.load %arg4[%c0_26, %c0_27] : memref<128x512xbf16, #tpu.memory_space<vmem>>, vector<128x512xbf16>
    %cst_28 = arith.constant dense<0.000000e+00> : vector<2x512xf32>
    %78 = tpu.matmul %76, %77, %cst_28 {dimension_numbers = #tpu.dot_dimension_numbers<[1], [0], [0], [1], [0, 0, 1, 1], [], []>} : vector<2x128xbf16>, vector<128x512xbf16>, vector<2x512xf32> -> vector<2x512xf32>
    %79 = arith.addf %75, %78 : vector<2x512xf32>
    %80 = vector.extract_strided_slice %79 {offsets = [0, 0], sizes = [2, 128], strides = [1, 1]} : vector<2x512xf32> to vector<2x128xf32>
    %81 = arith.negf %80 : vector<2x128xf32>
    %82 = math.exp %81 : vector<2x128xf32>
    %cst_29 = arith.constant 1.000000e+00 : f32
    %83 = vector.broadcast %cst_29 : f32 to vector<2x128xf32>
    %84 = arith.addf %83, %82 : vector<2x128xf32>
    %85 = arith.divf %83, %84 : vector<2x128xf32>
    %86 = vector.extract_strided_slice %79 {offsets = [0, 128], sizes = [2, 128], strides = [1, 1]} : vector<2x512xf32> to vector<2x128xf32>
    %87 = arith.negf %86 : vector<2x128xf32>
    %88 = math.exp %87 : vector<2x128xf32>
    %cst_30 = arith.constant 1.000000e+00 : f32
    %89 = vector.broadcast %cst_30 : f32 to vector<2x128xf32>
    %90 = arith.addf %89, %88 : vector<2x128xf32>
    %91 = arith.divf %89, %90 : vector<2x128xf32>
    %92 = vector.extract_strided_slice %79 {offsets = [0, 256], sizes = [2, 128], strides = [1, 1]} : vector<2x512xf32> to vector<2x128xf32>
    %93 = math.tanh %92 : vector<2x128xf32>
    %94 = vector.extract_strided_slice %79 {offsets = [0, 384], sizes = [2, 128], strides = [1, 1]} : vector<2x512xf32> to vector<2x128xf32>
    %95 = arith.negf %94 : vector<2x128xf32>
    %96 = math.exp %95 : vector<2x128xf32>
    %cst_31 = arith.constant 1.000000e+00 : f32
    %97 = vector.broadcast %cst_31 : f32 to vector<2x128xf32>
    %98 = arith.addf %97, %96 : vector<2x128xf32>
    %99 = arith.divf %97, %98 : vector<2x128xf32>
    %100 = arith.mulf %91, %69 : vector<2x128xf32>
    %101 = arith.mulf %85, %93 : vector<2x128xf32>
    %102 = arith.addf %100, %101 : vector<2x128xf32>
    %103 = math.tanh %102 : vector<2x128xf32>
    %104 = arith.mulf %99, %103 : vector<2x128xf32>
    %c2 = arith.constant 2 : index
    %c0_32 = arith.constant 0 : index
    %c0_33 = arith.constant 0 : index
    %105 = vector.load %arg6[%c2, %c0_32, %c0_33] : memref<4x2x128xf32, #tpu.memory_space<vmem>>, vector<1x2x128xf32>
    %106 = vector.shape_cast %105 : vector<1x2x128xf32> to vector<2x128xf32>
    %107 = vector.shape_cast %104 : vector<2x128xf32> to vector<1x2x128xf32>
    tpu.vector_store %arg6[%c2, %c0_32, %c0_33], %107 {strides = array<i32>} : memref<4x2x128xf32, #tpu.memory_space<vmem>>, vector<1x2x128xf32>,
    %108 = vector.extract_strided_slice %6 {offsets = [6, 0], sizes = [2, 512], strides = [1, 1]} : vector<8x512xf32> to vector<2x512xf32>
    %109 = arith.truncf %104 : vector<2x128xf32> to vector<2x128xbf16>
    %c0_34 = arith.constant 0 : index
    %c0_35 = arith.constant 0 : index
    %110 = vector.load %arg4[%c0_34, %c0_35] : memref<128x512xbf16, #tpu.memory_space<vmem>>, vector<128x512xbf16>
    %cst_36 = arith.constant dense<0.000000e+00> : vector<2x512xf32>
    %111 = tpu.matmul %109, %110, %cst_36 {dimension_numbers = #tpu.dot_dimension_numbers<[1], [0], [0], [1], [0, 0, 1, 1], [], []>} : vector<2x128xbf16>, vector<128x512xbf16>, vector<2x512xf32> -> vector<2x512xf32>
    %112 = arith.addf %108, %111 : vector<2x512xf32>
    %113 = vector.extract_strided_slice %112 {offsets = [0, 0], sizes = [2, 128], strides = [1, 1]} : vector<2x512xf32> to vector<2x128xf32>
    %114 = arith.negf %113 : vector<2x128xf32>
    %115 = math.exp %114 : vector<2x128xf32>
    %cst_37 = arith.constant 1.000000e+00 : f32
    %116 = vector.broadcast %cst_37 : f32 to vector<2x128xf32>
    %117 = arith.addf %116, %115 : vector<2x128xf32>
    %118 = arith.divf %116, %117 : vector<2x128xf32>
    %119 = vector.extract_strided_slice %112 {offsets = [0, 128], sizes = [2, 128], strides = [1, 1]} : vector<2x512xf32> to vector<2x128xf32>
    %120 = arith.negf %119 : vector<2x128xf32>
    %121 = math.exp %120 : vector<2x128xf32>
    %cst_38 = arith.constant 1.000000e+00 : f32
    %122 = vector.broadcast %cst_38 : f32 to vector<2x128xf32>
    %123 = arith.addf %122, %121 : vector<2x128xf32>
    %124 = arith.divf %122, %123 : vector<2x128xf32>
    %125 = vector.extract_strided_slice %112 {offsets = [0, 256], sizes = [2, 128], strides = [1, 1]} : vector<2x512xf32> to vector<2x128xf32>
    %126 = math.tanh %125 : vector<2x128xf32>
    %127 = vector.extract_strided_slice %112 {offsets = [0, 384], sizes = [2, 128], strides = [1, 1]} : vector<2x512xf32> to vector<2x128xf32>
    %128 = arith.negf %127 : vector<2x128xf32>
    %129 = math.exp %128 : vector<2x128xf32>
    %cst_39 = arith.constant 1.000000e+00 : f32
    %130 = vector.broadcast %cst_39 : f32 to vector<2x128xf32>
    %131 = arith.addf %130, %129 : vector<2x128xf32>
    %132 = arith.divf %130, %131 : vector<2x128xf32>
    %133 = arith.mulf %124, %102 : vector<2x128xf32>
    %134 = arith.mulf %118, %126 : vector<2x128xf32>
    %135 = arith.addf %133, %134 : vector<2x128xf32>
    %136 = math.tanh %135 : vector<2x128xf32>
    %137 = arith.mulf %132, %136 : vector<2x128xf32>
    %c3 = arith.constant 3 : index
    %c0_40 = arith.constant 0 : index
    %c0_41 = arith.constant 0 : index
    %138 = vector.load %arg6[%c3, %c0_40, %c0_41] : memref<4x2x128xf32, #tpu.memory_space<vmem>>, vector<1x2x128xf32>
    %139 = vector.shape_cast %138 : vector<1x2x128xf32> to vector<2x128xf32>
    %140 = vector.shape_cast %137 : vector<2x128xf32> to vector<1x2x128xf32>
    tpu.vector_store %arg6[%c3, %c0_40, %c0_41], %140 {strides = array<i32>} : memref<4x2x128xf32, #tpu.memory_space<vmem>>, vector<1x2x128xf32>,
    %c0_42 = arith.constant 0 : index
    %c0_43 = arith.constant 0 : index
    %141 = vector.load %arg7[%c0_42, %c0_43] : memref<2x128xf32, #tpu.memory_space<vmem>>, vector<2x128xf32>
    tpu.vector_store %arg7[%c0_42, %c0_43], %137 {strides = array<i32>} : memref<2x128xf32, #tpu.memory_space<vmem>>, vector<2x128xf32>,
    %c0_44 = arith.constant 0 : index
    %c0_45 = arith.constant 0 : index
    %142 = vector.load %arg8[%c0_44, %c0_45] : memref<2x128xf32, #tpu.memory_space<vmem>>, vector<2x128xf32>
    tpu.vector_store %arg8[%c0_44, %c0_45], %135 {strides = array<i32>} : memref<2x128xf32, #tpu.memory_space<vmem>>, vector<2x128xf32>,
    return
  }
}

</mosaic_0001>

<llo_original>
// kernel: decoder_forward.3
$region0: #{decoder_forward.3}
  #allocation0 [shape = 'u32[]', space=smem, size = 0x4, offset = 0x4, fixed_abs, tag = 'smem constant byte address 0x4 - core index']
  #allocation1 [shape = 'u32[144,128]{1,0:T(1,128)}', space=vmem, size = 0x12000, scoped, tag = 'internal scratch']
  %s0 = inlined_call_operand.vmem [shape: f32[8,128], index: 0, kind: input, shape index: {}]
  %s1 = inlined_call_operand.vmem [shape: bf16[128,512], index: 1, kind: input, shape index: {}]
  %s2 = inlined_call_operand.vmem [shape: f32[1,512], index: 2, kind: input, shape index: {}]
  %s3 = inlined_call_operand.vmem [shape: f32[8,512], index: 3, kind: output, shape index: {}]
  %s4 = sld [smem:[#allocation0]]
  $region86: #{decoder_forward.3} parent=0
    _
  %s6 = ssub.s32 1, %s4
  %s7 = scalar_select 0, %s6, %s4
  $region1: #{decoder_forward.3} parent=0
    #allocation2 [shape = 'u8[65536]{0}', space=vmem, size = 0x10000, scoped, tag = 'input window, operand 1']
    loop: start=0, step=1, limit=6
    $region2: #{decoder_forward.3} parent=1 // loop_pre_header
      _
    $region3: #{decoder_forward.3} parent=1 // loop_header
      %s9 = sphi 0, %s13
      %p10 = scmp.ge.s32.totalorder %s9, 6
      %s17 = sphi 0, %s17
      %s19 = sphi 0, %s17
      %s20 = sphi 0, %s19
      %s34 = sphi 0, %s20
      %s40 = sphi 0, %s42
      %s43 = sphi 0, %s40
      %s44 = sphi 0, %s43
      %s60 = sphi 0, %s44
      %s66 = sphi 0, %s68
      %s69 = sphi 0, %s66
      %s70 = sphi 0, %s69
      %s86 = sphi 0, %s70
      %s92 = sphi 0, %s94
      %s95 = sphi 0, %s92
      %s96 = sphi 0, %s95
      %s112 = sphi 0, %s96
    $region4: #{decoder_forward.3} parent=1 // loop_header_branch
      %12 = sbr.rel (%p10) target = $region8
    $region5: #{decoder_forward.3} parent=1 // loop_body
      %s14 = ssub.s32 %s9, 1
      %s15 = ssub.s32 %s9, 2
      %s16 = sadd.s32 %s9, 1
      %s18 = sadd.s32 %s17, 1
      %p21 = scmp.eq.s32.totalorder %s9, 3
      %p22 = scmp.ne.s32.totalorder %s17, %s19
      %p23 = scmp.eq.s32.totalorder %s9, 0
      %p24 = por %p22, %p23
      %p25 = scmp.ne.s32.totalorder %s17, %s19
      %p26 = scmp.eq.s32.totalorder %s14, 3
      %p27 = por %p25, %p26
      %p28 = scmp.ne.s32.totalorder %s19, %s20
      %p29 = scmp.eq.s32.totalorder %s14, 0
      %p30 = por %p28, %p29
      %p31 = scmp.ne.s32.totalorder %s19, %s20
      %p32 = scmp.eq.s32.totalorder %s15, 3
      %p33 = por %p31, %p32
      %p35 = scmp.ne.s32.totalorder %s20, %s34
      %p36 = scmp.eq.s32.totalorder %s15, 0
      %p37 = por %p35, %p36
      %s38 = ssub.s32 %s9, %s16
      %p39 = scmp.eq.s32.totalorder %s38, 0
      %s41 = sadd.s32 %s40, 1
      %s42 = scalar_select %p39, %s40, %s41
      %p45 = pneg %p39
      %p46 = scmp.eq.s32.totalorder %s9, 3
      %p47 = por %p45, %p46
      %p48 = scmp.ne.s32.totalorder %s40, %s43
      %p49 = scmp.eq.s32.totalorder %s9, 0
      %p50 = por %p48, %p49
      %p51 = scmp.ne.s32.totalorder %s40, %s43
      %p52 = scmp.eq.s32.totalorder %s14, 3
      %p53 = por %p51, %p52
      %p54 = scmp.ne.s32.totalorder %s43, %s44
      %p55 = scmp.eq.s32.totalorder %s14, 0
      %p56 = por %p54, %p55
      %p57 = scmp.ne.s32.totalorder %s43, %s44
      %p58 = scmp.eq.s32.totalorder %s15, 3
      %p59 = por %p57, %p58
      %p61 = scmp.ne.s32.totalorder %s44, %s60
      %p62 = scmp.eq.s32.totalorder %s15, 0
      %p63 = por %p61, %p62
      %s64 = ssub.s32 %s9, %s16
      %p65 = scmp.eq.s32.totalorder %s64, 0
      %s67 = sadd.s32 %s66, 1
      %s68 = scalar_select %p65, %s66, %s67
      %p71 = pneg %p65
      %p72 = scmp.eq.s32.totalorder %s9, 3
      %p73 = por %p71, %p72
      %p74 = scmp.ne.s32.totalorder %s66, %s69
      %p75 = scmp.eq.s32.totalorder %s9, 0
      %p76 = por %p74, %p75
      %p77 = scmp.ne.s32.totalorder %s66, %s69
      %p78 = scmp.eq.s32.totalorder %s14, 3
      %p79 = por %p77, %p78
      %p80 = scmp.ne.s32.totalorder %s69, %s70
      %p81 = scmp.eq.s32.totalorder %s14, 0
      %p82 = por %p80, %p81
      %p83 = scmp.ne.s32.totalorder %s69, %s70
      %p84 = scmp.eq.s32.totalorder %s15, 3
      %p85 = por %p83, %p84
      %p87 = scmp.ne.s32.totalorder %s70, %s86
      %p88 = scmp.eq.s32.totalorder %s15, 0
      %p89 = por %p87, %p88
      %s90 = ssub.s32 %s9, %s16
      %p91 = scmp.eq.s32.totalorder %s90, 0
      %s93 = sadd.s32 %s92, 1
      %s94 = scalar_select %p91, %s92, %s93
      %p97 = pneg %p91
      %p98 = scmp.eq.s32.totalorder %s9, 3
      %p99 = por %p97, %p98
      %p100 = scmp.ne.s32.totalorder %s92, %s95
      %p101 = scmp.eq.s32.totalorder %s9, 0
      %p102 = por %p100, %p101
      %p103 = scmp.ne.s32.totalorder %s92, %s95
      %p104 = scmp.eq.s32.totalorder %s14, 3
      %p105 = por %p103, %p104
      %p106 = scmp.ne.s32.totalorder %s95, %s96
      %p107 = scmp.eq.s32.totalorder %s14, 0
      %p108 = por %p106, %p107
      %p109 = scmp.ne.s32.totalorder %s95, %s96
      %p110 = scmp.eq.s32.totalorder %s15, 3
      %p111 = por %p109, %p110
      %p113 = scmp.ne.s32.totalorder %s96, %s112
      %p114 = scmp.eq.s32.totalorder %s15, 0
      %p115 = por %p113, %p114
      %p116 = scmp.le.s32.totalorder 1, %s9
      %p117 = scmp.lt.s32.totalorder %s9, 5
      %p118 = pnand %p116, %p117
      %p119 = pneg %p118
      // Predicated region
      $region9: #{decoder_forward.3} parent=5 // pred_check
        _
      $region10: #{decoder_forward.3} parent=5 // pred_check_branch
        %121 = sbr.rel (%p118) target = $region12
      $region11: #{decoder_forward.3} parent=5 // pred_region
        %s122 = ssub.s32 %s9, 1
        // Predicated region
        $region13: #{decoder_forward.3} parent=11 // pred_check
          %p123 = pneg %p30
        $region14: #{decoder_forward.3} parent=11 // pred_check_branch
          %125 = sbr.rel (%p123) target = $region16
        $region15: #{decoder_forward.3} parent=11 // pred_region
          _
        $region16: #{decoder_forward.3} parent=11 // pred_fallthru
          _
      $region12: #{decoder_forward.3} parent=5 // pred_fallthru
        _
      %p126 = scmp.lt.s32.totalorder %s9, 4
      // Predicated region
      $region17: #{decoder_forward.3} parent=5 // pred_check
        %p127 = pneg %p126
      $region18: #{decoder_forward.3} parent=5 // pred_check_branch
        %129 = sbr.rel (%p127) target = $region20
      $region19: #{decoder_forward.3} parent=5 // pred_region
        // Predicated region
        $region21: #{decoder_forward.3} parent=19 // pred_check
          %p130 = pneg %p50
        $region22: #{decoder_forward.3} parent=19 // pred_check_branch
          %132 = sbr.rel (%p130) target = $region24
        $region23: #{decoder_forward.3} parent=19 // pred_region
          %s133 = sand.u32 %s40, 1
          %s134 = sand.u32 %s40, 1
          %s135 = smul.addr %s134, 64
          %s136 = scalar_lea.vmem [#allocation2], %s135
          %s137 = smul.addr %s9, 4
          %s138 = scalar_lea.vmem %s1, %s137
          // Predicated region
          $region25: #{decoder_forward.3} parent=23 // pred_check
            _
          $region26: #{decoder_forward.3} parent=23 // pred_check_branch
            %140 = sbr.rel (0) target = $region28
          $region27: #{decoder_forward.3} parent=23 // pred_region
            // Predicated region
            $region29: #{decoder_forward.3} parent=27 // pred_check
              _
            $region30: #{decoder_forward.3} parent=27 // pred_check_branch
              %142 = sbr.rel target = $region32
            $region31: #{decoder_forward.3} parent=27 // pred_region
              // Predicated region
              $region44: #{decoder_forward.3} parent=31 // pred_check
                _
              $region45: #{decoder_forward.3} parent=31 // pred_check_branch
                %187 = sbr.rel (0) target = $region47
              $region46: #{decoder_forward.3} parent=31 // pred_region
                loop: start=0, step=1, limit=1
                $region48: #{decoder_forward.3} parent=46 // loop_pre_header
                  _
                $region49: #{decoder_forward.3} parent=46 // loop_header
                  %s189 = sphi 0, %s193
                  %p190 = scmp.ge.s32.totalorder %s189, 1
                  %s194 = sphi %s138, %s138
                  %s195 = sphi %s136, %s136
                $region50: #{decoder_forward.3} parent=46 // loop_header_branch
                  %192 = sbr.rel (%p190) target = $region54
                $region51: #{decoder_forward.3} parent=46 // loop_body
                  _
                $region52: #{decoder_forward.3} parent=46 // loop_footer
                  %s193 = sadd.s32 1, %s189
                $region53: #{decoder_forward.3} parent=46 // loop_footer_branch
                  %188 = sbr.rel target = $region49
                $region54: #{decoder_forward.3} parent=46 // loop_exit
                  _
                loop: start=0, step=1, limit=1
                $region55: #{decoder_forward.3} parent=46 // loop_pre_header
                  _
                $region56: #{decoder_forward.3} parent=46 // loop_header
                  %s198 = sphi 0, %s202
                  %p199 = scmp.ge.s32.totalorder %s198, 1
                  %s203 = sphi %s138, %s138
                  %s204 = sphi %s136, %s136
                $region57: #{decoder_forward.3} parent=46 // loop_header_branch
                  %201 = sbr.rel (%p199) target = $region61
                $region58: #{decoder_forward.3} parent=46 // loop_body
                  %v205 = vld [vmem:[%s203] sm:$0xf]
                  %206 = vst [vmem:[%s204] sm:$0xf] %v205
                  %v207 = vld [vmem:[%s203 + $0x10] sm:$0xf]
                  %208 = vst [vmem:[%s204 + $0x4] sm:$0xf] %v207
                  %v209 = vld [vmem:[%s203 + $0x20] sm:$0xf]
                  %210 = vst [vmem:[%s204 + $0x8] sm:$0xf] %v209
                  %v211 = vld [vmem:[%s203 + $0x30] sm:$0xf]
                  %212 = vst [vmem:[%s204 + $0xc] sm:$0xf] %v211
                  %v213 = vld [vmem:[%s203 + $0x40] sm:$0xf]
                  %214 = vst [vmem:[%s204 + $0x10] sm:$0xf] %v213
                  %v215 = vld [vmem:[%s203 + $0x50] sm:$0xf]
                  %216 = vst [vmem:[%s204 + $0x14] sm:$0xf] %v215
                  %v217 = vld [vmem:[%s203 + $0x60] sm:$0xf]
                  %218 = vst [vmem:[%s204 + $0x18] sm:$0xf] %v217
                  %v219 = vld [vmem:[%s203 + $0x70] sm:$0xf]
                  %220 = vst [vmem:[%s204 + $0x1c] sm:$0xf] %v219
                  %v221 = vld [vmem:[%s203 + $0x80] sm:$0xf]
                  %222 = vst [vmem:[%s204 + $0x20] sm:$0xf] %v221
                  %v223 = vld [vmem:[%s203 + $0x90] sm:$0xf]
                  %224 = vst [vmem:[%s204 + $0x24] sm:$0xf] %v223
                  %v225 = vld [vmem:[%s203 + $0xa0] sm:$0xf]
                  %226 = vst [vmem:[%s204 + $0x28] sm:$0xf] %v225
                  %v227 = vld [vmem:[%s203 + $0xb0] sm:$0xf]
                  %228 = vst [vmem:[%s204 + $0x2c] sm:$0xf] %v227
                  %v229 = vld [vmem:[%s203 + $0xc0] sm:$0xf]
                  %230 = vst [vmem:[%s204 + $0x30] sm:$0xf] %v229
                  %v231 = vld [vmem:[%s203 + $0xd0] sm:$0xf]
                  %232 = vst [vmem:[%s204 + $0x34] sm:$0xf] %v231
                  %v233 = vld [vmem:[%s203 + $0xe0] sm:$0xf]
                  %234 = vst [vmem:[%s204 + $0x38] sm:$0xf] %v233
                  %v235 = vld [vmem:[%s203 + $0xf0] sm:$0xf]
                  %236 = vst [vmem:[%s204 + $0x3c] sm:$0xf] %v235
                $region59: #{decoder_forward.3} parent=46 // loop_footer
                  %s202 = sadd.s32 1, %s198
                $region60: #{decoder_forward.3} parent=46 // loop_footer_branch
                  %197 = sbr.rel target = $region56
                $region61: #{decoder_forward.3} parent=46 // loop_exit
                  _
              $region47: #{decoder_forward.3} parent=31 // pred_fallthru
                _
            $region32: #{decoder_forward.3} parent=27 // pred_fallthru
              _
            // Predicated region
            $region33: #{decoder_forward.3} parent=27 // pred_check
              _
            $region34: #{decoder_forward.3} parent=27 // pred_check_branch
              %144 = sbr.rel (0) target = $region36
            $region35: #{decoder_forward.3} parent=27 // pred_region
              loop: start=0, step=1, limit=1
              $region37: #{decoder_forward.3} parent=35 // loop_pre_header
                _
              $region38: #{decoder_forward.3} parent=35 // loop_header
                %s147 = sphi 0, %s151
                %p148 = scmp.ge.s32.totalorder %s147, 1
                %s152 = sphi %s138, %s138
                %s153 = sphi %s136, %s136
              $region39: #{decoder_forward.3} parent=35 // loop_header_branch
                %150 = sbr.rel (%p148) target = $region43
              $region40: #{decoder_forward.3} parent=35 // loop_body
                %v154 = vld [vmem:[%s152] sm:$0xf]
                %155 = vst [vmem:[%s153] sm:$0xf] %v154
                %v156 = vld [vmem:[%s152 + $0x10] sm:$0xf]
                %157 = vst [vmem:[%s153 + $0x4] sm:$0xf] %v156
                %v158 = vld [vmem:[%s152 + $0x20] sm:$0xf]
                %159 = vst [vmem:[%s153 + $0x8] sm:$0xf] %v158
                %v160 = vld [vmem:[%s152 + $0x30] sm:$0xf]
                %161 = vst [vmem:[%s153 + $0xc] sm:$0xf] %v160
                %v162 = vld [vmem:[%s152 + $0x40] sm:$0xf]
                %163 = vst [vmem:[%s153 + $0x10] sm:$0xf] %v162
                %v164 = vld [vmem:[%s152 + $0x50] sm:$0xf]
                %165 = vst [vmem:[%s153 + $0x14] sm:$0xf] %v164
                %v166 = vld [vmem:[%s152 + $0x60] sm:$0xf]
                %167 = vst [vmem:[%s153 + $0x18] sm:$0xf] %v166
                %v168 = vld [vmem:[%s152 + $0x70] sm:$0xf]
                %169 = vst [vmem:[%s153 + $0x1c] sm:$0xf] %v168
                %v170 = vld [vmem:[%s152 + $0x80] sm:$0xf]
                %171 = vst [vmem:[%s153 + $0x20] sm:$0xf] %v170
                %v172 = vld [vmem:[%s152 + $0x90] sm:$0xf]
                %173 = vst [vmem:[%s153 + $0x24] sm:$0xf] %v172
                %v174 = vld [vmem:[%s152 + $0xa0] sm:$0xf]
                %175 = vst [vmem:[%s153 + $0x28] sm:$0xf] %v174
                %v176 = vld [vmem:[%s152 + $0xb0] sm:$0xf]
                %177 = vst [vmem:[%s153 + $0x2c] sm:$0xf] %v176
                %v178 = vld [vmem:[%s152 + $0xc0] sm:$0xf]
                %179 = vst [vmem:[%s153 + $0x30] sm:$0xf] %v178
                %v180 = vld [vmem:[%s152 + $0xd0] sm:$0xf]
                %181 = vst [vmem:[%s153 + $0x34] sm:$0xf] %v180
                %v182 = vld [vmem:[%s152 + $0xe0] sm:$0xf]
                %183 = vst [vmem:[%s153 + $0x38] sm:$0xf] %v182
                %v184 = vld [vmem:[%s152 + $0xf0] sm:$0xf]
                %185 = vst [vmem:[%s153 + $0x3c] sm:$0xf] %v184
              $region41: #{decoder_forward.3} parent=35 // loop_footer
                %s151 = sadd.s32 1, %s147
              $region42: #{decoder_forward.3} parent=35 // loop_footer_branch
                %146 = sbr.rel target = $region38
              $region43: #{decoder_forward.3} parent=35 // loop_exit
                _
            $region36: #{decoder_forward.3} parent=27 // pred_fallthru
              _
          $region28: #{decoder_forward.3} parent=23 // pred_fallthru
            _
          %237 = vnop
        $region24: #{decoder_forward.3} parent=19 // pred_fallthru
          _
        // Predicated region
        $region62: #{decoder_forward.3} parent=19 // pred_check
          %p238 = pneg %p76
        $region63: #{decoder_forward.3} parent=19 // pred_check_branch
          %240 = sbr.rel (%p238) target = $region65
        $region64: #{decoder_forward.3} parent=19 // pred_region
          %p241 = scmp.lt.s32.totalorder %s9, 3
          %s242 = scalar_select %p241, %s9, 3
          %s243 = scalar_lea.vmem %s2, %s242
        $region65: #{decoder_forward.3} parent=19 // pred_fallthru
          _
      $region20: #{decoder_forward.3} parent=5 // pred_fallthru
        _
      %p244 = scmp.le.s32.totalorder 1, %s9
      %p245 = scmp.lt.s32.totalorder %s9, 5
      %p246 = pnand %p244, %p245
      %p247 = pneg %p246
      // Predicated region
      $region66: #{decoder_forward.3} parent=5 // pred_check
        _
      $region67: #{decoder_forward.3} parent=5 // pred_check_branch
        %249 = sbr.rel (%p246) target = $region69
      $region68: #{decoder_forward.3} parent=5 // pred_region
        %s250 = ssub.s32 %s9, 1
        %s251 = sand.u32 %s43, 1
        %s252 = sand.u32 %s43, 1
        %s253 = smul.addr %s252, 64
        %s254 = scalar_lea.vmem [#allocation2], %s253
        // Predicated region
        $region70: #{decoder_forward.3} parent=68 // pred_check
          %p255 = pneg %p56
        $region71: #{decoder_forward.3} parent=68 // pred_check_branch
          %257 = sbr.rel (%p255) target = $region73
        $region72: #{decoder_forward.3} parent=68 // pred_region
          _
        $region73: #{decoder_forward.3} parent=68 // pred_fallthru
          _
        %p258 = pneg %p30
        %p259 = pneg %p27
        %s260 = sand.u32 %s43, 1
        %s261 = sand.u32 %s43, 1
        %s262 = smul.addr %s261, 64
        %s263 = scalar_lea.vmem [#allocation2], %s262
        %p264 = pneg %p56
        %p265 = pneg %p53
        %p266 = scmp.lt.s32.totalorder %s14, 3
        %s267 = scalar_select %p266, %s14, 3
        %s268 = scalar_lea.vmem %s2, %s267
        %p269 = pneg %p82
        %p270 = pneg %p79
        %p271 = pneg %p108
        %p272 = pneg %p105
        %p273 = scmp.lt.s32.totalorder %s14, 3
        %s274 = scalar_select %p273, %s14, 3
        %s275 = smul.addr %s274, 8
        %s276 = scalar_lea.vmem %s3, %s275
        %p277 = scmp.lt.s32.totalorder %s14, 3
        %s278 = scalar_select %p277, %s14, 3
        %s279 = scalar_lea.vmem %s2, %s278
        %p280 = scmp.lt.s32.totalorder %s14, 3
        %s281 = scalar_select %p280, %s14, 3
        %s282 = smul.addr %s281, 8
        %s283 = scalar_lea.vmem %s3, %s282
        %v285 = vld [vmem:[%s0] sm:$0xff]
        %v286 = vpack.c.bf16 %v285, %v285
        %v287 = vld [vmem:[%s254] sm:$0xf]
        %v288 = vld [vmem:[%s254 + $0x4] sm:$0xf]
        %v289 = vld [vmem:[%s254 + $0x8] sm:$0xf]
        %v290 = vld [vmem:[%s254 + $0xc] sm:$0xf]
        %v291 = vld [vmem:[%s254 + $0x10] sm:$0xf]
        %v292 = vld [vmem:[%s254 + $0x14] sm:$0xf]
        %v293 = vld [vmem:[%s254 + $0x18] sm:$0xf]
        %v294 = vld [vmem:[%s254 + $0x1c] sm:$0xf]
        %v295 = vld [vmem:[%s254 + $0x20] sm:$0xf]
        %v296 = vld [vmem:[%s254 + $0x24] sm:$0xf]
        %v297 = vld [vmem:[%s254 + $0x28] sm:$0xf]
        %v298 = vld [vmem:[%s254 + $0x2c] sm:$0xf]
        %v299 = vld [vmem:[%s254 + $0x30] sm:$0xf]
        %v300 = vld [vmem:[%s254 + $0x34] sm:$0xf]
        %v301 = vld [vmem:[%s254 + $0x38] sm:$0xf]
        %v302 = vld [vmem:[%s254 + $0x3c] sm:$0xf]
        %v303 = vld [vmem:[%s279] sm:$0x1]
        %v305 = vlaneseq
        %v306 = vshrl.u32 %v305, 7
        %v307 = vsub.s32 0, %v306
        %v308 = vrot.slane %v303, %v307
        %v326 = vunpack.c.l.b16 %v287
        %v327 = vunpack.c.l.b16 %v288
        %v328 = vunpack.c.l.b16 %v289
        %v329 = vunpack.c.l.b16 %v290
        %v330 = vunpack.c.l.b16 %v291
        %v331 = vunpack.c.l.b16 %v292
        %v332 = vunpack.c.l.b16 %v293
        %v333 = vunpack.c.l.b16 %v294
        %v334 = vunpack.c.l.b16 %v295
        %v335 = vunpack.c.l.b16 %v296
        %v336 = vunpack.c.l.b16 %v297
        %v337 = vunpack.c.l.b16 %v298
        %v338 = vunpack.c.l.b16 %v299
        %v339 = vunpack.c.l.b16 %v300
        %v340 = vunpack.c.l.b16 %v301
        %v341 = vunpack.c.l.b16 %v302
        %v342 = vpack.c.b16 %v327, %v326
        %v343 = vpack.c.b16 %v329, %v328
        %v344 = vpack.c.b16 %v331, %v330
        %v345 = vpack.c.b16 %v333, %v332
        %v346 = vpack.c.b16 %v335, %v334
        %v347 = vpack.c.b16 %v337, %v336
        %v348 = vpack.c.b16 %v339, %v338
        %v349 = vpack.c.b16 %v341, %v340
        %358 = vmatprep.subr.bf16.mxu0 0
        %359 = vmatpush1.bf16.msra.mxu0 %v342
        %360 = vmatprep.subr.bf16.mxu0 0
        %361 = vmatpush1.bf16.msra.mxu0 %v343
        %362 = vmatprep.subr.bf16.mxu0 0
        %363 = vmatpush1.bf16.msra.mxu0 %v344
        %364 = vmatprep.subr.bf16.mxu0 0
        %365 = vmatpush1.bf16.msra.mxu0 %v345
        %366 = vmatprep.subr.bf16.mxu0 0
        %367 = vmatpush1.bf16.msra.mxu0 %v346
        %368 = vmatprep.subr.bf16.mxu0 0
        %369 = vmatpush1.bf16.msra.mxu0 %v347
        %370 = vmatprep.subr.bf16.mxu0 0
        %371 = vmatpush1.bf16.msra.mxu0 %v348
        %372 = vmatprep.subr.bf16.mxu0 0
        %373 = vmatpush1.bf16.msra.mxu0 %v349
        %374 = vmatprep.subr.bf16.mxu0 0
        %375 = vmatpush1.bf16.msra.mxu0 0
        %376 = vmatprep.subr.bf16.mxu0 0
        %377 = vmatpush1.bf16.msra.mxu0 0
        %378 = vmatprep.subr.bf16.mxu0 0
        %379 = vmatpush1.bf16.msra.mxu0 0
        %380 = vmatprep.subr.bf16.mxu0 0
        %381 = vmatpush1.bf16.msra.mxu0 0
        %382 = vmatprep.subr.bf16.mxu0 0
        %383 = vmatpush1.bf16.msra.mxu0 0
        %384 = vmatprep.subr.bf16.mxu0 0
        %385 = vmatpush1.bf16.msra.mxu0 0
        %386 = vmatprep.subr.bf16.mxu0 0
        %387 = vmatpush1.bf16.msra.mxu0 0
        %388 = vmatprep.subr.bf16.mxu0 0
        %389 = vmatpush1.bf16.msra.mxu0 0
        %390 = vmatprep.mubr.bf16.mxu0 0
        %391 = vmatmul.mubr.bf16.gmra.mrb[0].mxu0 %v286
        %v392 = vpop.f32.mrb[0].mxu0
        %v393 = vadd.f32 %v308, %v392
        %v394 = vpop.f32.mrb[0].mxu0
        %v395 = vpop.f32.mrb[0].mxu0
        %v396 = vpop.f32.mrb[0].mxu0
        %397 = vdwg.mxu0
        %398 = vst [vmem:[%s283] sm:$0xff] %v393
        %p399 = scmp.lt.s32.totalorder %s14, 3
        %s400 = scalar_select %p399, %s14, 3
        %s401 = smul.addr %s400, 8
        %s402 = scalar_lea.vmem %s3, %s401
        // Predicated region
        $region74: #{decoder_forward.3} parent=68 // pred_check
          %p403 = pneg %p105
        $region75: #{decoder_forward.3} parent=68 // pred_check_branch
          %405 = sbr.rel (%p403) target = $region77
        $region76: #{decoder_forward.3} parent=68 // pred_region
          _
        $region77: #{decoder_forward.3} parent=68 // pred_fallthru
          _
      $region69: #{decoder_forward.3} parent=5 // pred_fallthru
        _
      %p406 = scmp.le.s32.totalorder 2, %s9
      // Predicated region
      $region78: #{decoder_forward.3} parent=5 // pred_check
        %p407 = pneg %p406
      $region79: #{decoder_forward.3} parent=5 // pred_check_branch
        %409 = sbr.rel (%p407) target = $region81
      $region80: #{decoder_forward.3} parent=5 // pred_region
        %s410 = ssub.s32 %s9, 2
        // Predicated region
        $region82: #{decoder_forward.3} parent=80 // pred_check
          %p411 = pneg %p111
        $region83: #{decoder_forward.3} parent=80 // pred_check_branch
          %413 = sbr.rel (%p411) target = $region85
        $region84: #{decoder_forward.3} parent=80 // pred_region
          %p414 = scmp.lt.s32.totalorder %s15, 3
          %s415 = scalar_select %p414, %s15, 3
          %s416 = smul.addr %s415, 8
          %s417 = scalar_lea.vmem %s3, %s416
        $region85: #{decoder_forward.3} parent=80 // pred_fallthru
          _
      $region81: #{decoder_forward.3} parent=5 // pred_fallthru
        _
    $region6: #{decoder_forward.3} parent=1 // loop_footer
      %s13 = sadd.s32 1, %s9
    $region7: #{decoder_forward.3} parent=1 // loop_footer_branch
      %8 = sbr.rel target = $region3
    $region8: #{decoder_forward.3} parent=1 // loop_exit
      _

// kernel: decoder_forward.2
$region0: #{decoder_forward.2}
  #allocation0 [shape = 'u32[]', space=smem, size = 0x4, offset = 0x4, fixed_abs, tag = 'smem constant byte address 0x4 - core index']
  #allocation1 [shape = 'u32[144,128]{1,0:T(1,128)}', space=vmem, size = 0x12000, scoped, tag = 'internal scratch']
  %s0 = inlined_call_operand.vmem [shape: f32[8,64], index: 0, kind: input, shape index: {}]
  %s1 = inlined_call_operand.vmem [shape: f32[2,128], index: 1, kind: input, shape index: {}]
  %s2 = inlined_call_operand.vmem [shape: f32[2,128], index: 2, kind: input, shape index: {}]
  %s3 = inlined_call_operand.vmem [shape: bf16[64,512], index: 3, kind: input, shape index: {}]
  %s4 = inlined_call_operand.vmem [shape: bf16[128,512], index: 4, kind: input, shape index: {}]
  %s5 = inlined_call_operand.vmem [shape: f32[1,512], index: 5, kind: input, shape index: {}]
  %s6 = inlined_call_operand.vmem [shape: f32[4,2,128], index: 6, kind: output, shape index: {0}]
  %s7 = inlined_call_operand.hbm [shape: f32[2,128], index: 7, kind: output, shape index: {1}]
  %s8 = inlined_call_operand.hbm [shape: f32[2,128], index: 8, kind: output, shape index: {2}]
  %9 = xla_tuple %s6, %s7, %s8
  %s10 = sld [smem:[#allocation0]]
  $region50: #{decoder_forward.2} parent=0
    _
  %s12 = ssub.s32 1, %s10
  %s13 = scalar_select 0, %s12, %s10
  $region1: #{decoder_forward.2} parent=0
    #allocation2 [shape = 'u8[1024]{0}', space=vmem, size = 0x400, scoped, tag = 'output window, operand 1, single buffered']
    #allocation3 [shape = 's32[1]{0}', space=sflag, size = 0x4, scoped, tag = 'scoped memory for decoder_forward.2']
    #allocation4 [shape = 'u8[1024]{0}', space=vmem, size = 0x400, scoped, tag = 'output window, operand 2, single buffered']
    #allocation5 [shape = 's32[1]{0}', space=sflag, size = 0x4, scoped, tag = 'scoped memory for decoder_forward.2']
    %14 = vsyncpa [#allocation3], 0
    %15 = vsyncpa [#allocation5], 0
    // Predicated region
    $region2: #{decoder_forward.2} parent=1 // pred_check
      _
    $region3: #{decoder_forward.2} parent=1 // pred_check_branch
      %17 = sbr.rel (0) target = $region5
    $region4: #{decoder_forward.2} parent=1 // pred_region
      _
    $region5: #{decoder_forward.2} parent=1 // pred_fallthru
      _
    // Predicated region
    $region6: #{decoder_forward.2} parent=1 // pred_check
      _
    $region7: #{decoder_forward.2} parent=1 // pred_check_branch
      %19 = sbr.rel (0) target = $region9
    $region8: #{decoder_forward.2} parent=1 // pred_region
      _
    $region9: #{decoder_forward.2} parent=1 // pred_fallthru
      _
    // Predicated region
    $region10: #{decoder_forward.2} parent=1 // pred_check
      _
    $region11: #{decoder_forward.2} parent=1 // pred_check_branch
      %21 = sbr.rel (0) target = $region13
    $region12: #{decoder_forward.2} parent=1 // pred_region
      _
    $region13: #{decoder_forward.2} parent=1 // pred_fallthru
      _
    // Predicated region
    $region14: #{decoder_forward.2} parent=1 // pred_check
      _
    $region15: #{decoder_forward.2} parent=1 // pred_check_branch
      %23 = sbr.rel (0) target = $region17
    $region16: #{decoder_forward.2} parent=1 // pred_region
      _
    $region17: #{decoder_forward.2} parent=1 // pred_fallthru
      _
    // Predicated region
    $region18: #{decoder_forward.2} parent=1 // pred_check
      _
    $region19: #{decoder_forward.2} parent=1 // pred_check_branch
      %25 = sbr.rel (0) target = $region21
    $region20: #{decoder_forward.2} parent=1 // pred_region
      _
    $region21: #{decoder_forward.2} parent=1 // pred_fallthru
      _
    // Predicated region
    $region22: #{decoder_forward.2} parent=1 // pred_check
      _
    $region23: #{decoder_forward.2} parent=1 // pred_check_branch
      %27 = sbr.rel (0) target = $region25
    $region24: #{decoder_forward.2} parent=1 // pred_region
      _
    $region25: #{decoder_forward.2} parent=1 // pred_fallthru
      _
    %v29 = vld [vmem:[%s0] sm:$0xff]
    %v30 = vpack.c.bf16 %v29, %v29
    %v31 = vld [vmem:[%s3] sm:$0xff]
    %v32 = vld [vmem:[%s3 + $0x8] sm:$0xff]
    %v33 = vld [vmem:[%s3 + $0x10] sm:$0xff]
    %v34 = vld [vmem:[%s3 + $0x18] sm:$0xff]
    %v35 = vld [vmem:[%s3 + $0x20] sm:$0xff]
    %v36 = vld [vmem:[%s3 + $0x28] sm:$0xff]
    %v37 = vld [vmem:[%s3 + $0x30] sm:$0xff]
    %v38 = vld [vmem:[%s3 + $0x38] sm:$0xff]
    %v39 = vld [vmem:[%s3 + $0x40] sm:$0xff]
    %v40 = vld [vmem:[%s3 + $0x48] sm:$0xff]
    %v41 = vld [vmem:[%s3 + $0x50] sm:$0xff]
    %v42 = vld [vmem:[%s3 + $0x58] sm:$0xff]
    %v43 = vld [vmem:[%s3 + $0x60] sm:$0xff]
    %v44 = vld [vmem:[%s3 + $0x68] sm:$0xff]
    %v45 = vld [vmem:[%s3 + $0x70] sm:$0xff]
    %v46 = vld [vmem:[%s3 + $0x78] sm:$0xff]
    %v47 = vld [vmem:[%s5] sm:$0xf]
    %v49 = vlaneseq
    %v50 = vshrl.u32 %v49, 7
    %v51 = vsub.s32 0, %v50
    %v52 = vrot.slane %v47, %v51
    %v53 = vlaneseq
    %v54 = vshrl.u32 %v53, 7
    %v55 = vsub.s32 1, %v54
    %v56 = vrot.slane %v47, %v55
    %v57 = vlaneseq
    %v58 = vshrl.u32 %v57, 7
    %v59 = vsub.s32 2, %v58
    %v60 = vrot.slane %v47, %v59
    %v61 = vlaneseq
    %v62 = vshrl.u32 %v61, 7
    %v63 = vsub.s32 3, %v62
    %v64 = vrot.slane %v47, %v63
    %v85 = vunpack.c.l.b16 %v31
    %v86 = vunpack.c.h.b16 %v31
    %v87 = vunpack.c.l.b16 %v32
    %v88 = vunpack.c.h.b16 %v32
    %v89 = vunpack.c.l.b16 %v33
    %v90 = vunpack.c.h.b16 %v33
    %v91 = vunpack.c.l.b16 %v34
    %v92 = vunpack.c.h.b16 %v34
    %v93 = vunpack.c.l.b16 %v35
    %v94 = vunpack.c.h.b16 %v35
    %v95 = vunpack.c.l.b16 %v36
    %v96 = vunpack.c.h.b16 %v36
    %v97 = vunpack.c.l.b16 %v37
    %v98 = vunpack.c.h.b16 %v37
    %v99 = vunpack.c.l.b16 %v38
    %v100 = vunpack.c.h.b16 %v38
    %v101 = vunpack.c.l.b16 %v39
    %v102 = vunpack.c.h.b16 %v39
    %v103 = vunpack.c.l.b16 %v40
    %v104 = vunpack.c.h.b16 %v40
    %v105 = vunpack.c.l.b16 %v41
    %v106 = vunpack.c.h.b16 %v41
    %v107 = vunpack.c.l.b16 %v42
    %v108 = vunpack.c.h.b16 %v42
    %v109 = vunpack.c.l.b16 %v43
    %v110 = vunpack.c.h.b16 %v43
    %v111 = vunpack.c.l.b16 %v44
    %v112 = vunpack.c.h.b16 %v44
    %v113 = vunpack.c.l.b16 %v45
    %v114 = vunpack.c.h.b16 %v45
    %v115 = vunpack.c.l.b16 %v46
    %v116 = vunpack.c.h.b16 %v46
    %v117 = vpack.c.b16 %v89, %v85
    %v118 = vpack.c.b16 %v90, %v86
    %v119 = vpack.c.b16 %v91, %v87
    %v120 = vpack.c.b16 %v92, %v88
    %v121 = vpack.c.b16 %v97, %v93
    %v122 = vpack.c.b16 %v98, %v94
    %v123 = vpack.c.b16 %v99, %v95
    %v124 = vpack.c.b16 %v100, %v96
    %v125 = vpack.c.b16 %v105, %v101
    %v126 = vpack.c.b16 %v106, %v102
    %v127 = vpack.c.b16 %v107, %v103
    %v128 = vpack.c.b16 %v108, %v104
    %v129 = vpack.c.b16 %v113, %v109
    %v130 = vpack.c.b16 %v114, %v110
    %v131 = vpack.c.b16 %v115, %v111
    %v132 = vpack.c.b16 %v116, %v112
    %vm149 = vcmask 523264
    %v151 = vsel %vm149, %v30, 0
    %153 = vmatprep.subr.bf16.mxu0 %v118
    %154 = vmatpush1.bf16.msra.mxu0 %v117
    %155 = vmatprep.subr.bf16.mxu0 %v122
    %156 = vmatpush1.bf16.msra.mxu0 %v121
    %157 = vmatprep.subr.bf16.mxu0 %v126
    %158 = vmatpush1.bf16.msra.mxu0 %v125
    %159 = vmatprep.subr.bf16.mxu0 %v130
    %160 = vmatpush1.bf16.msra.mxu0 %v129
    %161 = vmatprep.subr.bf16.mxu0 0
    %162 = vmatpush1.bf16.msra.mxu0 0
    %163 = vmatprep.subr.bf16.mxu0 0
    %164 = vmatpush1.bf16.msra.mxu0 0
    %165 = vmatprep.subr.bf16.mxu0 0
    %166 = vmatpush1.bf16.msra.mxu0 0
    %167 = vmatprep.subr.bf16.mxu0 0
    %168 = vmatpush1.bf16.msra.mxu0 0
    %169 = vmatprep.subr.bf16.mxu0 0
    %170 = vmatpush1.bf16.msra.mxu0 0
    %171 = vmatprep.subr.bf16.mxu0 0
    %172 = vmatpush1.bf16.msra.mxu0 0
    %173 = vmatprep.subr.bf16.mxu0 0
    %174 = vmatpush1.bf16.msra.mxu0 0
    %175 = vmatprep.subr.bf16.mxu0 0
    %176 = vmatpush1.bf16.msra.mxu0 0
    %177 = vmatprep.subr.bf16.mxu0 0
    %178 = vmatpush1.bf16.msra.mxu0 0
    %179 = vmatprep.subr.bf16.mxu0 0
    %180 = vmatpush1.bf16.msra.mxu0 0
    %181 = vmatprep.subr.bf16.mxu0 0
    %182 = vmatpush1.bf16.msra.mxu0 0
    %183 = vmatprep.subr.bf16.mxu0 0
    %184 = vmatpush1.bf16.msra.mxu0 0
    %185 = vmatprep.mubr.bf16.mxu0 0
    %186 = vmatmul.mubr.bf16.gmra.mrb[0].mxu0 %v151
    %v187 = vpop.f32.mrb[0].mxu0
    %v188 = vadd.f32 %v52, %v187
    %v189 = vpop.f32.mrb[0].mxu0
    %v190 = vadd.f32 %v56, %v189
    %v191 = vpop.f32.mrb[0].mxu0
    %v192 = vpop.f32.mrb[0].mxu0
    %193 = vdwg.mxu0
    %194 = vmatprep.subr.bf16.mxu0 %v120
    %195 = vmatpush1.bf16.msra.mxu0 %v119
    %196 = vmatprep.subr.bf16.mxu0 %v124
    %197 = vmatpush1.bf16.msra.mxu0 %v123
    %198 = vmatprep.subr.bf16.mxu0 %v128
    %199 = vmatpush1.bf16.msra.mxu0 %v127
    %200 = vmatprep.subr.bf16.mxu0 %v132
    %201 = vmatpush1.bf16.msra.mxu0 %v131
    %202 = vmatprep.subr.bf16.mxu0 0
    %203 = vmatpush1.bf16.msra.mxu0 0
    %204 = vmatprep.subr.bf16.mxu0 0
    %205 = vmatpush1.bf16.msra.mxu0 0
    %206 = vmatprep.subr.bf16.mxu0 0
    %207 = vmatpush1.bf16.msra.mxu0 0
    %208 = vmatprep.subr.bf16.mxu0 0
    %209 = vmatpush1.bf16.msra.mxu0 0
    %210 = vmatprep.subr.bf16.mxu0 0
    %211 = vmatpush1.bf16.msra.mxu0 0
    %212 = vmatprep.subr.bf16.mxu0 0
    %213 = vmatpush1.bf16.msra.mxu0 0
    %214 = vmatprep.subr.bf16.mxu0 0
    %215 = vmatpush1.bf16.msra.mxu0 0
    %216 = vmatprep.subr.bf16.mxu0 0
    %217 = vmatpush1.bf16.msra.mxu0 0
    %218 = vmatprep.subr.bf16.mxu0 0
    %219 = vmatpush1.bf16.msra.mxu0 0
    %220 = vmatprep.subr.bf16.mxu0 0
    %221 = vmatpush1.bf16.msra.mxu0 0
    %222 = vmatprep.subr.bf16.mxu0 0
    %223 = vmatpush1.bf16.msra.mxu0 0
    %224 = vmatprep.subr.bf16.mxu0 0
    %225 = vmatpush1.bf16.msra.mxu0 0
    %226 = vmatprep.mubr.bf16.mxu0 0
    %227 = vmatmul.mubr.bf16.gmra.mrb[0].mxu0 %v151
    %v228 = vpop.f32.mrb[0].mxu0
    %v229 = vadd.f32 %v60, %v228
    %v230 = vpop.f32.mrb[0].mxu0
    %v231 = vadd.f32 %v64, %v230
    %v232 = vpop.f32.mrb[0].mxu0
    %v233 = vpop.f32.mrb[0].mxu0
    %234 = vdwg.mxu0
    %v235 = vld [vmem:[%s1] sm:$0x3]
    %v236 = vld [vmem:[%s2] sm:$0x3]
    %v237 = vpack.c.bf16 %v235, %v235
    %v238 = vld [vmem:[%s4] sm:$0xff]
    %v239 = vld [vmem:[%s4 + $0x8] sm:$0xff]
    %v240 = vld [vmem:[%s4 + $0x10] sm:$0xff]
    %v241 = vld [vmem:[%s4 + $0x18] sm:$0xff]
    %v242 = vld [vmem:[%s4 + $0x20] sm:$0xff]
    %v243 = vld [vmem:[%s4 + $0x28] sm:$0xff]
    %v244 = vld [vmem:[%s4 + $0x30] sm:$0xff]
    %v245 = vld [vmem:[%s4 + $0x38] sm:$0xff]
    %v246 = vld [vmem:[%s4 + $0x40] sm:$0xff]
    %v247 = vld [vmem:[%s4 + $0x48] sm:$0xff]
    %v248 = vld [vmem:[%s4 + $0x50] sm:$0xff]
    %v249 = vld [vmem:[%s4 + $0x58] sm:$0xff]
    %v250 = vld [vmem:[%s4 + $0x60] sm:$0xff]
    %v251 = vld [vmem:[%s4 + $0x68] sm:$0xff]
    %v252 = vld [vmem:[%s4 + $0x70] sm:$0xff]
    %v253 = vld [vmem:[%s4 + $0x78] sm:$0xff]
    %v254 = vld [vmem:[%s4 + $0x80] sm:$0xff]
    %v255 = vld [vmem:[%s4 + $0x88] sm:$0xff]
    %v256 = vld [vmem:[%s4 + $0x90] sm:$0xff]
    %v257 = vld [vmem:[%s4 + $0x98] sm:$0xff]
    %v258 = vld [vmem:[%s4 + $0xa0] sm:$0xff]
    %v259 = vld [vmem:[%s4 + $0xa8] sm:$0xff]
    %v260 = vld [vmem:[%s4 + $0xb0] sm:$0xff]
    %v261 = vld [vmem:[%s4 + $0xb8] sm:$0xff]
    %v262 = vld [vmem:[%s4 + $0xc0] sm:$0xff]
    %v263 = vld [vmem:[%s4 + $0xc8] sm:$0xff]
    %v264 = vld [vmem:[%s4 + $0xd0] sm:$0xff]
    %v265 = vld [vmem:[%s4 + $0xd8] sm:$0xff]
    %v266 = vld [vmem:[%s4 + $0xe0] sm:$0xff]
    %v267 = vld [vmem:[%s4 + $0xe8] sm:$0xff]
    %v268 = vld [vmem:[%s4 + $0xf0] sm:$0xff]
    %v269 = vld [vmem:[%s4 + $0xf8] sm:$0xff]
    %v302 = vunpack.c.l.b16 %v238
    %v303 = vunpack.c.h.b16 %v238
    %v304 = vunpack.c.l.b16 %v239
    %v305 = vunpack.c.h.b16 %v239
    %v306 = vunpack.c.l.b16 %v240
    %v307 = vunpack.c.h.b16 %v240
    %v308 = vunpack.c.l.b16 %v241
    %v309 = vunpack.c.h.b16 %v241
    %v310 = vunpack.c.l.b16 %v242
    %v311 = vunpack.c.h.b16 %v242
    %v312 = vunpack.c.l.b16 %v243
    %v313 = vunpack.c.h.b16 %v243
    %v314 = vunpack.c.l.b16 %v244
    %v315 = vunpack.c.h.b16 %v244
    %v316 = vunpack.c.l.b16 %v245
    %v317 = vunpack.c.h.b16 %v245
    %v318 = vunpack.c.l.b16 %v246
    %v319 = vunpack.c.h.b16 %v246
    %v320 = vunpack.c.l.b16 %v247
    %v321 = vunpack.c.h.b16 %v247
    %v322 = vunpack.c.l.b16 %v248
    %v323 = vunpack.c.h.b16 %v248
    %v324 = vunpack.c.l.b16 %v249
    %v325 = vunpack.c.h.b16 %v249
    %v326 = vunpack.c.l.b16 %v250
    %v327 = vunpack.c.h.b16 %v250
    %v328 = vunpack.c.l.b16 %v251
    %v329 = vunpack.c.h.b16 %v251
    %v330 = vunpack.c.l.b16 %v252
    %v331 = vunpack.c.h.b16 %v252
    %v332 = vunpack.c.l.b16 %v253
    %v333 = vunpack.c.h.b16 %v253
    %v334 = vunpack.c.l.b16 %v254
    %v335 = vunpack.c.h.b16 %v254
    %v336 = vunpack.c.l.b16 %v255
    %v337 = vunpack.c.h.b16 %v255
    %v338 = vunpack.c.l.b16 %v256
    %v339 = vunpack.c.h.b16 %v256
    %v340 = vunpack.c.l.b16 %v257
    %v341 = vunpack.c.h.b16 %v257
    %v342 = vunpack.c.l.b16 %v258
    %v343 = vunpack.c.h.b16 %v258
    %v344 = vunpack.c.l.b16 %v259
    %v345 = vunpack.c.h.b16 %v259
    %v346 = vunpack.c.l.b16 %v260
    %v347 = vunpack.c.h.b16 %v260
    %v348 = vunpack.c.l.b16 %v261
    %v349 = vunpack.c.h.b16 %v261
    %v350 = vunpack.c.l.b16 %v262
    %v351 = vunpack.c.h.b16 %v262
    %v352 = vunpack.c.l.b16 %v263
    %v353 = vunpack.c.h.b16 %v263
    %v354 = vunpack.c.l.b16 %v264
    %v355 = vunpack.c.h.b16 %v264
    %v356 = vunpack.c.l.b16 %v265
    %v357 = vunpack.c.h.b16 %v265
    %v358 = vunpack.c.l.b16 %v266
    %v359 = vunpack.c.h.b16 %v266
    %v360 = vunpack.c.l.b16 %v267
    %v361 = vunpack.c.h.b16 %v267
    %v362 = vunpack.c.l.b16 %v268
    %v363 = vunpack.c.h.b16 %v268
    %v364 = vunpack.c.l.b16 %v269
    %v365 = vunpack.c.h.b16 %v269
    %v366 = vpack.c.b16 %v306, %v302
    %v367 = vpack.c.b16 %v307, %v303
    %v368 = vpack.c.b16 %v308, %v304
    %v369 = vpack.c.b16 %v309, %v305
    %v370 = vpack.c.b16 %v314, %v310
    %v371 = vpack.c.b16 %v315, %v311
    %v372 = vpack.c.b16 %v316, %v312
    %v373 = vpack.c.b16 %v317, %v313
    %v374 = vpack.c.b16 %v322, %v318
    %v375 = vpack.c.b16 %v323, %v319
    %v376 = vpack.c.b16 %v324, %v320
    %v377 = vpack.c.b16 %v325, %v321
    %v378 = vpack.c.b16 %v330, %v326
    %v379 = vpack.c.b16 %v331, %v327
    %v380 = vpack.c.b16 %v332, %v328
    %v381 = vpack.c.b16 %v333, %v329
    %v382 = vpack.c.b16 %v338, %v334
    %v383 = vpack.c.b16 %v339, %v335
    %v384 = vpack.c.b16 %v340, %v336
    %v385 = vpack.c.b16 %v341, %v337
    %v386 = vpack.c.b16 %v346, %v342
    %v387 = vpack.c.b16 %v347, %v343
    %v388 = vpack.c.b16 %v348, %v344
    %v389 = vpack.c.b16 %v349, %v345
    %v390 = vpack.c.b16 %v354, %v350
    %v391 = vpack.c.b16 %v355, %v351
    %v392 = vpack.c.b16 %v356, %v352
    %v393 = vpack.c.b16 %v357, %v353
    %v394 = vpack.c.b16 %v362, %v358
    %v395 = vpack.c.b16 %v363, %v359
    %v396 = vpack.c.b16 %v364, %v360
    %v397 = vpack.c.b16 %v365, %v361
    %430 = vmatprep.subr.bf16.mxu0 %v367
    %431 = vmatpush1.bf16.msra.mxu0 %v366
    %432 = vmatprep.subr.bf16.mxu0 %v371
    %433 = vmatpush1.bf16.msra.mxu0 %v370
    %434 = vmatprep.subr.bf16.mxu0 %v375
    %435 = vmatpush1.bf16.msra.mxu0 %v374
    %436 = vmatprep.subr.bf16.mxu0 %v379
    %437 = vmatpush1.bf16.msra.mxu0 %v378
    %438 = vmatprep.subr.bf16.mxu0 %v383
    %439 = vmatpush1.bf16.msra.mxu0 %v382
    %440 = vmatprep.subr.bf16.mxu0 %v387
    %441 = vmatpush1.bf16.msra.mxu0 %v386
    %442 = vmatprep.subr.bf16.mxu0 %v391
    %443 = vmatpush1.bf16.msra.mxu0 %v390
    %444 = vmatprep.subr.bf16.mxu0 %v395
    %445 = vmatpush1.bf16.msra.mxu0 %v394
    %446 = vmatprep.subr.bf16.mxu0 0
    %447 = vmatpush1.bf16.msra.mxu0 0
    %448 = vmatprep.subr.bf16.mxu0 0
    %449 = vmatpush1.bf16.msra.mxu0 0
    %450 = vmatprep.subr.bf16.mxu0 0
    %451 = vmatpush1.bf16.msra.mxu0 0
    %452 = vmatprep.subr.bf16.mxu0 0
    %453 = vmatpush1.bf16.msra.mxu0 0
    %454 = vmatprep.subr.bf16.mxu0 0
    %455 = vmatpush1.bf16.msra.mxu0 0
    %456 = vmatprep.subr.bf16.mxu0 0
    %457 = vmatpush1.bf16.msra.mxu0 0
    %458 = vmatprep.subr.bf16.mxu0 0
    %459 = vmatpush1.bf16.msra.mxu0 0
    %460 = vmatprep.subr.bf16.mxu0 0
    %461 = vmatpush1.bf16.msra.mxu0 0
    %462 = vmatprep.mubr.bf16.mxu0 0
    %463 = vmatmul.mubr.bf16.gmra.mrb[0].mxu0 %v237
    %v464 = vpop.f32.mrb[0].mxu0
    %v465 = vadd.f32 0.0, %v464
    %v466 = vpop.f32.mrb[0].mxu0
    %v467 = vadd.f32 0.0, %v466
    %v468 = vpop.f32.mrb[0].mxu0
    %v469 = vpop.f32.mrb[0].mxu0
    %470 = vdwg.mxu0
    %471 = vmatprep.subr.bf16.mxu0 %v369
    %472 = vmatpush1.bf16.msra.mxu0 %v368
    %473 = vmatprep.subr.bf16.mxu0 %v373
    %474 = vmatpush1.bf16.msra.mxu0 %v372
    %475 = vmatprep.subr.bf16.mxu0 %v377
    %476 = vmatpush1.bf16.msra.mxu0 %v376
    %477 = vmatprep.subr.bf16.mxu0 %v381
    %478 = vmatpush1.bf16.msra.mxu0 %v380
    %479 = vmatprep.subr.bf16.mxu0 %v385
    %480 = vmatpush1.bf16.msra.mxu0 %v384
    %481 = vmatprep.subr.bf16.mxu0 %v389
    %482 = vmatpush1.bf16.msra.mxu0 %v388
    %483 = vmatprep.subr.bf16.mxu0 %v393
    %484 = vmatpush1.bf16.msra.mxu0 %v392
    %485 = vmatprep.subr.bf16.mxu0 %v397
    %486 = vmatpush1.bf16.msra.mxu0 %v396
    %487 = vmatprep.subr.bf16.mxu0 0
    %488 = vmatpush1.bf16.msra.mxu0 0
    %489 = vmatprep.subr.bf16.mxu0 0
    %490 = vmatpush1.bf16.msra.mxu0 0
    %491 = vmatprep.subr.bf16.mxu0 0
    %492 = vmatpush1.bf16.msra.mxu0 0
    %493 = vmatprep.subr.bf16.mxu0 0
    %494 = vmatpush1.bf16.msra.mxu0 0
    %495 = vmatprep.subr.bf16.mxu0 0
    %496 = vmatpush1.bf16.msra.mxu0 0
    %497 = vmatprep.subr.bf16.mxu0 0
    %498 = vmatpush1.bf16.msra.mxu0 0
    %499 = vmatprep.subr.bf16.mxu0 0
    %500 = vmatpush1.bf16.msra.mxu0 0
    %501 = vmatprep.subr.bf16.mxu0 0
    %502 = vmatpush1.bf16.msra.mxu0 0
    %503 = vmatprep.mubr.bf16.mxu0 0
    %504 = vmatmul.mubr.bf16.gmra.mrb[0].mxu0 %v237
    %v505 = vpop.f32.mrb[0].mxu0
    %v506 = vadd.f32 0.0, %v505
    %v507 = vpop.f32.mrb[0].mxu0
    %v508 = vadd.f32 0.0, %v507
    %v509 = vpop.f32.mrb[0].mxu0
    %v510 = vpop.f32.mrb[0].mxu0
    %511 = vdwg.mxu0
    %v512 = vadd.f32 %v188, %v465
    %v513 = vadd.f32 %v190, %v467
    %v514 = vadd.f32 %v229, %v506
    %v515 = vadd.f32 %v231, %v508
    %v516 = vxor.u32 %v512, 2147483648
    %v517 = vmul.f32 %v516, 1.442695
    %v518 = vpow.pop %v517
    %v519 = vadd.f32 %v518, 1.0
    %v520 = vrcp.pop %v519
    %v521 = vmul.f32 1.0, %v520
    %v522 = vxor.u32 %v513, 2147483648
    %v523 = vmul.f32 %v522, 1.442695
    %v524 = vpow.pop %v523
    %v525 = vadd.f32 %v524, 1.0
    %v526 = vrcp.pop %v525
    %v527 = vmul.f32 1.0, %v526
    %v528 = vtanh.pop %v514
    %v529 = vxor.u32 %v515, 2147483648
    %v530 = vmul.f32 %v529, 1.442695
    %v531 = vpow.pop %v530
    %v532 = vadd.f32 %v531, 1.0
    %v533 = vrcp.pop %v532
    %v534 = vmul.f32 1.0, %v533
    %v535 = vmul.f32 %v527, %v236
    %v536 = vmul.f32 %v521, %v528
    %v537 = vadd.f32 %v535, %v536
    %v538 = vtanh.pop %v537
    %v539 = vmul.f32 %v534, %v538
    %540 = vst [vmem:[%s6] sm:$0x3] %v539
    %v541 = vpack.c.bf16 %v539, %v539
    %v542 = vld [vmem:[%s4] sm:$0xff]
    %v543 = vld [vmem:[%s4 + $0x8] sm:$0xff]
    %v544 = vld [vmem:[%s4 + $0x10] sm:$0xff]
    %v545 = vld [vmem:[%s4 + $0x18] sm:$0xff]
    %v546 = vld [vmem:[%s4 + $0x20] sm:$0xff]
    %v547 = vld [vmem:[%s4 + $0x28] sm:$0xff]
    %v548 = vld [vmem:[%s4 + $0x30] sm:$0xff]
    %v549 = vld [vmem:[%s4 + $0x38] sm:$0xff]
    %v550 = vld [vmem:[%s4 + $0x40] sm:$0xff]
    %v551 = vld [vmem:[%s4 + $0x48] sm:$0xff]
    %v552 = vld [vmem:[%s4 + $0x50] sm:$0xff]
    %v553 = vld [vmem:[%s4 + $0x58] sm:$0xff]
    %v554 = vld [vmem:[%s4 + $0x60] sm:$0xff]
    %v555 = vld [vmem:[%s4 + $0x68] sm:$0xff]
    %v556 = vld [vmem:[%s4 + $0x70] sm:$0xff]
    %v557 = vld [vmem:[%s4 + $0x78] sm:$0xff]
    %v558 = vld [vmem:[%s4 + $0x80] sm:$0xff]
    %v559 = vld [vmem:[%s4 + $0x88] sm:$0xff]
    %v560 = vld [vmem:[%s4 + $0x90] sm:$0xff]
    %v561 = vld [vmem:[%s4 + $0x98] sm:$0xff]
    %v562 = vld [vmem:[%s4 + $0xa0] sm:$0xff]
    %v563 = vld [vmem:[%s4 + $0xa8] sm:$0xff]
    %v564 = vld [vmem:[%s4 + $0xb0] sm:$0xff]
    %v565 = vld [vmem:[%s4 + $0xb8] sm:$0xff]
    %v566 = vld [vmem:[%s4 + $0xc0] sm:$0xff]
    %v567 = vld [vmem:[%s4 + $0xc8] sm:$0xff]
    %v568 = vld [vmem:[%s4 + $0xd0] sm:$0xff]
    %v569 = vld [vmem:[%s4 + $0xd8] sm:$0xff]
    %v570 = vld [vmem:[%s4 + $0xe0] sm:$0xff]
    %v571 = vld [vmem:[%s4 + $0xe8] sm:$0xff]
    %v572 = vld [vmem:[%s4 + $0xf0] sm:$0xff]
    %v573 = vld [vmem:[%s4 + $0xf8] sm:$0xff]
    %v606 = vunpack.c.l.b16 %v542
    %v607 = vunpack.c.h.b16 %v542
    %v608 = vunpack.c.l.b16 %v543
    %v609 = vunpack.c.h.b16 %v543
    %v610 = vunpack.c.l.b16 %v544
    %v611 = vunpack.c.h.b16 %v544
    %v612 = vunpack.c.l.b16 %v545
    %v613 = vunpack.c.h.b16 %v545
    %v614 = vunpack.c.l.b16 %v546
    %v615 = vunpack.c.h.b16 %v546
    %v616 = vunpack.c.l.b16 %v547
    %v617 = vunpack.c.h.b16 %v547
    %v618 = vunpack.c.l.b16 %v548
    %v619 = vunpack.c.h.b16 %v548
    %v620 = vunpack.c.l.b16 %v549
    %v621 = vunpack.c.h.b16 %v549
    %v622 = vunpack.c.l.b16 %v550
    %v623 = vunpack.c.h.b16 %v550
    %v624 = vunpack.c.l.b16 %v551
    %v625 = vunpack.c.h.b16 %v551
    %v626 = vunpack.c.l.b16 %v552
    %v627 = vunpack.c.h.b16 %v552
    %v628 = vunpack.c.l.b16 %v553
    %v629 = vunpack.c.h.b16 %v553
    %v630 = vunpack.c.l.b16 %v554
    %v631 = vunpack.c.h.b16 %v554
    %v632 = vunpack.c.l.b16 %v555
    %v633 = vunpack.c.h.b16 %v555
    %v634 = vunpack.c.l.b16 %v556
    %v635 = vunpack.c.h.b16 %v556
    %v636 = vunpack.c.l.b16 %v557
    %v637 = vunpack.c.h.b16 %v557
    %v638 = vunpack.c.l.b16 %v558
    %v639 = vunpack.c.h.b16 %v558
    %v640 = vunpack.c.l.b16 %v559
    %v641 = vunpack.c.h.b16 %v559
    %v642 = vunpack.c.l.b16 %v560
    %v643 = vunpack.c.h.b16 %v560
    %v644 = vunpack.c.l.b16 %v561
    %v645 = vunpack.c.h.b16 %v561
    %v646 = vunpack.c.l.b16 %v562
    %v647 = vunpack.c.h.b16 %v562
    %v648 = vunpack.c.l.b16 %v563
    %v649 = vunpack.c.h.b16 %v563
    %v650 = vunpack.c.l.b16 %v564
    %v651 = vunpack.c.h.b16 %v564
    %v652 = vunpack.c.l.b16 %v565
    %v653 = vunpack.c.h.b16 %v565
    %v654 = vunpack.c.l.b16 %v566
    %v655 = vunpack.c.h.b16 %v566
    %v656 = vunpack.c.l.b16 %v567
    %v657 = vunpack.c.h.b16 %v567
    %v658 = vunpack.c.l.b16 %v568
    %v659 = vunpack.c.h.b16 %v568
    %v660 = vunpack.c.l.b16 %v569
    %v661 = vunpack.c.h.b16 %v569
    %v662 = vunpack.c.l.b16 %v570
    %v663 = vunpack.c.h.b16 %v570
    %v664 = vunpack.c.l.b16 %v571
    %v665 = vunpack.c.h.b16 %v571
    %v666 = vunpack.c.l.b16 %v572
    %v667 = vunpack.c.h.b16 %v572
    %v668 = vunpack.c.l.b16 %v573
    %v669 = vunpack.c.h.b16 %v573
    %v670 = vpack.c.b16 %v610, %v606
    %v671 = vpack.c.b16 %v611, %v607
    %v672 = vpack.c.b16 %v612, %v608
    %v673 = vpack.c.b16 %v613, %v609
    %v674 = vpack.c.b16 %v618, %v614
    %v675 = vpack.c.b16 %v619, %v615
    %v676 = vpack.c.b16 %v620, %v616
    %v677 = vpack.c.b16 %v621, %v617
    %v678 = vpack.c.b16 %v626, %v622
    %v679 = vpack.c.b16 %v627, %v623
    %v680 = vpack.c.b16 %v628, %v624
    %v681 = vpack.c.b16 %v629, %v625
    %v682 = vpack.c.b16 %v634, %v630
    %v683 = vpack.c.b16 %v635, %v631
    %v684 = vpack.c.b16 %v636, %v632
    %v685 = vpack.c.b16 %v637, %v633
    %v686 = vpack.c.b16 %v642, %v638
    %v687 = vpack.c.b16 %v643, %v639
    %v688 = vpack.c.b16 %v644, %v640
    %v689 = vpack.c.b16 %v645, %v641
    %v690 = vpack.c.b16 %v650, %v646
    %v691 = vpack.c.b16 %v651, %v647
    %v692 = vpack.c.b16 %v652, %v648
    %v693 = vpack.c.b16 %v653, %v649
    %v694 = vpack.c.b16 %v658, %v654
    %v695 = vpack.c.b16 %v659, %v655
    %v696 = vpack.c.b16 %v660, %v656
    %v697 = vpack.c.b16 %v661, %v657
    %v698 = vpack.c.b16 %v666, %v662
    %v699 = vpack.c.b16 %v667, %v663
    %v700 = vpack.c.b16 %v668, %v664
    %v701 = vpack.c.b16 %v669, %v665
    %734 = vmatprep.subr.bf16.mxu0 %v671
    %735 = vmatpush1.bf16.msra.mxu0 %v670
    %736 = vmatprep.subr.bf16.mxu0 %v675
    %737 = vmatpush1.bf16.msra.mxu0 %v674
    %738 = vmatprep.subr.bf16.mxu0 %v679
    %739 = vmatpush1.bf16.msra.mxu0 %v678
    %740 = vmatprep.subr.bf16.mxu0 %v683
    %741 = vmatpush1.bf16.msra.mxu0 %v682
    %742 = vmatprep.subr.bf16.mxu0 %v687
    %743 = vmatpush1.bf16.msra.mxu0 %v686
    %744 = vmatprep.subr.bf16.mxu0 %v691
    %745 = vmatpush1.bf16.msra.mxu0 %v690
    %746 = vmatprep.subr.bf16.mxu0 %v695
    %747 = vmatpush1.bf16.msra.mxu0 %v694
    %748 = vmatprep.subr.bf16.mxu0 %v699
    %749 = vmatpush1.bf16.msra.mxu0 %v698
    %750 = vmatprep.subr.bf16.mxu0 0
    %751 = vmatpush1.bf16.msra.mxu0 0
    %752 = vmatprep.subr.bf16.mxu0 0
    %753 = vmatpush1.bf16.msra.mxu0 0
    %754 = vmatprep.subr.bf16.mxu0 0
    %755 = vmatpush1.bf16.msra.mxu0 0
    %756 = vmatprep.subr.bf16.mxu0 0
    %757 = vmatpush1.bf16.msra.mxu0 0
    %758 = vmatprep.subr.bf16.mxu0 0
    %759 = vmatpush1.bf16.msra.mxu0 0
    %760 = vmatprep.subr.bf16.mxu0 0
    %761 = vmatpush1.bf16.msra.mxu0 0
    %762 = vmatprep.subr.bf16.mxu0 0
    %763 = vmatpush1.bf16.msra.mxu0 0
    %764 = vmatprep.subr.bf16.mxu0 0
    %765 = vmatpush1.bf16.msra.mxu0 0
    %766 = vmatprep.mubr.bf16.mxu0 0
    %767 = vmatmul.mubr.bf16.gmra.mrb[0].mxu0 %v541
    %v768 = vpop.f32.mrb[0].mxu0
    %v769 = vadd.f32 0.0, %v768
    %v770 = vpop.f32.mrb[0].mxu0
    %v771 = vadd.f32 0.0, %v770
    %v772 = vpop.f32.mrb[0].mxu0
    %v773 = vpop.f32.mrb[0].mxu0
    %774 = vdwg.mxu0
    %775 = vmatprep.subr.bf16.mxu0 %v673
    %776 = vmatpush1.bf16.msra.mxu0 %v672
    %777 = vmatprep.subr.bf16.mxu0 %v677
    %778 = vmatpush1.bf16.msra.mxu0 %v676
    %779 = vmatprep.subr.bf16.mxu0 %v681
    %780 = vmatpush1.bf16.msra.mxu0 %v680
    %781 = vmatprep.subr.bf16.mxu0 %v685
    %782 = vmatpush1.bf16.msra.mxu0 %v684
    %783 = vmatprep.subr.bf16.mxu0 %v689
    %784 = vmatpush1.bf16.msra.mxu0 %v688
    %785 = vmatprep.subr.bf16.mxu0 %v693
    %786 = vmatpush1.bf16.msra.mxu0 %v692
    %787 = vmatprep.subr.bf16.mxu0 %v697
    %788 = vmatpush1.bf16.msra.mxu0 %v696
    %789 = vmatprep.subr.bf16.mxu0 %v701
    %790 = vmatpush1.bf16.msra.mxu0 %v700
    %791 = vmatprep.subr.bf16.mxu0 0
    %792 = vmatpush1.bf16.msra.mxu0 0
    %793 = vmatprep.subr.bf16.mxu0 0
    %794 = vmatpush1.bf16.msra.mxu0 0
    %795 = vmatprep.subr.bf16.mxu0 0
    %796 = vmatpush1.bf16.msra.mxu0 0
    %797 = vmatprep.subr.bf16.mxu0 0
    %798 = vmatpush1.bf16.msra.mxu0 0
    %799 = vmatprep.subr.bf16.mxu0 0
    %800 = vmatpush1.bf16.msra.mxu0 0
    %801 = vmatprep.subr.bf16.mxu0 0
    %802 = vmatpush1.bf16.msra.mxu0 0
    %803 = vmatprep.subr.bf16.mxu0 0
    %804 = vmatpush1.bf16.msra.mxu0 0
    %805 = vmatprep.subr.bf16.mxu0 0
    %806 = vmatpush1.bf16.msra.mxu0 0
    %807 = vmatprep.mubr.bf16.mxu0 0
    %808 = vmatmul.mubr.bf16.gmra.mrb[0].mxu0 %v541
    %v809 = vpop.f32.mrb[0].mxu0
    %v810 = vadd.f32 0.0, %v809
    %v811 = vpop.f32.mrb[0].mxu0
    %v812 = vadd.f32 0.0, %v811
    %v813 = vpop.f32.mrb[0].mxu0
    %v814 = vpop.f32.mrb[0].mxu0
    %815 = vdwg.mxu0
    %v820 = vrot.slane %v769, 6
    %v821 = vrot.slane %v771, 6
    %v822 = vrot.slane %v810, 6
    %v823 = vrot.slane %v812, 6
    %v828 = vadd.f32 %v188, %v820
    %v829 = vadd.f32 %v190, %v821
    %v830 = vadd.f32 %v229, %v822
    %v831 = vadd.f32 %v231, %v823
    %v832 = vxor.u32 %v828, 2147483648
    %v833 = vmul.f32 %v832, 1.442695
    %v834 = vpow.pop %v833
    %v835 = vadd.f32 %v834, 1.0
    %v836 = vrcp.pop %v835
    %v837 = vmul.f32 1.0, %v836
    %v838 = vxor.u32 %v829, 2147483648
    %v839 = vmul.f32 %v838, 1.442695
    %v840 = vpow.pop %v839
    %v841 = vadd.f32 %v840, 1.0
    %v842 = vrcp.pop %v841
    %v843 = vmul.f32 1.0, %v842
    %v844 = vtanh.pop %v830
    %v845 = vxor.u32 %v831, 2147483648
    %v846 = vmul.f32 %v845, 1.442695
    %v847 = vpow.pop %v846
    %v848 = vadd.f32 %v847, 1.0
    %v849 = vrcp.pop %v848
    %v850 = vmul.f32 1.0, %v849
    %v852 = vrot.slane %v537, 6
    %v854 = vmul.f32 %v843, %v852
    %v855 = vmul.f32 %v837, %v844
    %v856 = vadd.f32 %v854, %v855
    %v857 = vtanh.pop %v856
    %v858 = vmul.f32 %v850, %v857
    %s859 = scalar_lea.vmem %s6, 2
    %860 = vst [vmem:[%s859 - $0x2] sm:$0xc] %v858
    %v861 = vpack.c.bf16 %v858, %v858
    %v862 = vld [vmem:[%s4] sm:$0xff]
    %v863 = vld [vmem:[%s4 + $0x8] sm:$0xff]
    %v864 = vld [vmem:[%s4 + $0x10] sm:$0xff]
    %v865 = vld [vmem:[%s4 + $0x18] sm:$0xff]
    %v866 = vld [vmem:[%s4 + $0x20] sm:$0xff]
    %v867 = vld [vmem:[%s4 + $0x28] sm:$0xff]
    %v868 = vld [vmem:[%s4 + $0x30] sm:$0xff]
    %v869 = vld [vmem:[%s4 + $0x38] sm:$0xff]
    %v870 = vld [vmem:[%s4 + $0x40] sm:$0xff]
    %v871 = vld [vmem:[%s4 + $0x48] sm:$0xff]
    %v872 = vld [vmem:[%s4 + $0x50] sm:$0xff]
    %v873 = vld [vmem:[%s4 + $0x58] sm:$0xff]
    %v874 = vld [vmem:[%s4 + $0x60] sm:$0xff]
    %v875 = vld [vmem:[%s4 + $0x68] sm:$0xff]
    %v876 = vld [vmem:[%s4 + $0x70] sm:$0xff]
    %v877 = vld [vmem:[%s4 + $0x78] sm:$0xff]
    %v878 = vld [vmem:[%s4 + $0x80] sm:$0xff]
    %v879 = vld [vmem:[%s4 + $0x88] sm:$0xff]
    %v880 = vld [vmem:[%s4 + $0x90] sm:$0xff]
    %v881 = vld [vmem:[%s4 + $0x98] sm:$0xff]
    %v882 = vld [vmem:[%s4 + $0xa0] sm:$0xff]
    %v883 = vld [vmem:[%s4 + $0xa8] sm:$0xff]
    %v884 = vld [vmem:[%s4 + $0xb0] sm:$0xff]
    %v885 = vld [vmem:[%s4 + $0xb8] sm:$0xff]
    %v886 = vld [vmem:[%s4 + $0xc0] sm:$0xff]
    %v887 = vld [vmem:[%s4 + $0xc8] sm:$0xff]
    %v888 = vld [vmem:[%s4 + $0xd0] sm:$0xff]
    %v889 = vld [vmem:[%s4 + $0xd8] sm:$0xff]
    %v890 = vld [vmem:[%s4 + $0xe0] sm:$0xff]
    %v891 = vld [vmem:[%s4 + $0xe8] sm:$0xff]
    %v892 = vld [vmem:[%s4 + $0xf0] sm:$0xff]
    %v893 = vld [vmem:[%s4 + $0xf8] sm:$0xff]
    %v895 = vrot.slane %v861, 1
    %v929 = vunpack.c.l.b16 %v862
    %v930 = vunpack.c.h.b16 %v862
    %v931 = vunpack.c.l.b16 %v863
    %v932 = vunpack.c.h.b16 %v863
    %v933 = vunpack.c.l.b16 %v864
    %v934 = vunpack.c.h.b16 %v864
    %v935 = vunpack.c.l.b16 %v865
    %v936 = vunpack.c.h.b16 %v865
    %v937 = vunpack.c.l.b16 %v866
    %v938 = vunpack.c.h.b16 %v866
    %v939 = vunpack.c.l.b16 %v867
    %v940 = vunpack.c.h.b16 %v867
    %v941 = vunpack.c.l.b16 %v868
    %v942 = vunpack.c.h.b16 %v868
    %v943 = vunpack.c.l.b16 %v869
    %v944 = vunpack.c.h.b16 %v869
    %v945 = vunpack.c.l.b16 %v870
    %v946 = vunpack.c.h.b16 %v870
    %v947 = vunpack.c.l.b16 %v871
    %v948 = vunpack.c.h.b16 %v871
    %v949 = vunpack.c.l.b16 %v872
    %v950 = vunpack.c.h.b16 %v872
    %v951 = vunpack.c.l.b16 %v873
    %v952 = vunpack.c.h.b16 %v873
    %v953 = vunpack.c.l.b16 %v874
    %v954 = vunpack.c.h.b16 %v874
    %v955 = vunpack.c.l.b16 %v875
    %v956 = vunpack.c.h.b16 %v875
    %v957 = vunpack.c.l.b16 %v876
    %v958 = vunpack.c.h.b16 %v876
    %v959 = vunpack.c.l.b16 %v877
    %v960 = vunpack.c.h.b16 %v877
    %v961 = vunpack.c.l.b16 %v878
    %v962 = vunpack.c.h.b16 %v878
    %v963 = vunpack.c.l.b16 %v879
    %v964 = vunpack.c.h.b16 %v879
    %v965 = vunpack.c.l.b16 %v880
    %v966 = vunpack.c.h.b16 %v880
    %v967 = vunpack.c.l.b16 %v881
    %v968 = vunpack.c.h.b16 %v881
    %v969 = vunpack.c.l.b16 %v882
    %v970 = vunpack.c.h.b16 %v882
    %v971 = vunpack.c.l.b16 %v883
    %v972 = vunpack.c.h.b16 %v883
    %v973 = vunpack.c.l.b16 %v884
    %v974 = vunpack.c.h.b16 %v884
    %v975 = vunpack.c.l.b16 %v885
    %v976 = vunpack.c.h.b16 %v885
    %v977 = vunpack.c.l.b16 %v886
    %v978 = vunpack.c.h.b16 %v886
    %v979 = vunpack.c.l.b16 %v887
    %v980 = vunpack.c.h.b16 %v887
    %v981 = vunpack.c.l.b16 %v888
    %v982 = vunpack.c.h.b16 %v888
    %v983 = vunpack.c.l.b16 %v889
    %v984 = vunpack.c.h.b16 %v889
    %v985 = vunpack.c.l.b16 %v890
    %v986 = vunpack.c.h.b16 %v890
    %v987 = vunpack.c.l.b16 %v891
    %v988 = vunpack.c.h.b16 %v891
    %v989 = vunpack.c.l.b16 %v892
    %v990 = vunpack.c.h.b16 %v892
    %v991 = vunpack.c.l.b16 %v893
    %v992 = vunpack.c.h.b16 %v893
    %v993 = vpack.c.b16 %v933, %v929
    %v994 = vpack.c.b16 %v934, %v930
    %v995 = vpack.c.b16 %v935, %v931
    %v996 = vpack.c.b16 %v936, %v932
    %v997 = vpack.c.b16 %v941, %v937
    %v998 = vpack.c.b16 %v942, %v938
    %v999 = vpack.c.b16 %v943, %v939
    %v1000 = vpack.c.b16 %v944, %v940
    %v1001 = vpack.c.b16 %v949, %v945
    %v1002 = vpack.c.b16 %v950, %v946
    %v1003 = vpack.c.b16 %v951, %v947
    %v1004 = vpack.c.b16 %v952, %v948
    %v1005 = vpack.c.b16 %v957, %v953
    %v1006 = vpack.c.b16 %v958, %v954
    %v1007 = vpack.c.b16 %v959, %v955
    %v1008 = vpack.c.b16 %v960, %v956
    %v1009 = vpack.c.b16 %v965, %v961
    %v1010 = vpack.c.b16 %v966, %v962
    %v1011 = vpack.c.b16 %v967, %v963
    %v1012 = vpack.c.b16 %v968, %v964
    %v1013 = vpack.c.b16 %v973, %v969
    %v1014 = vpack.c.b16 %v974, %v970
    %v1015 = vpack.c.b16 %v975, %v971
    %v1016 = vpack.c.b16 %v976, %v972
    %v1017 = vpack.c.b16 %v981, %v977
    %v1018 = vpack.c.b16 %v982, %v978
    %v1019 = vpack.c.b16 %v983, %v979
    %v1020 = vpack.c.b16 %v984, %v980
    %v1021 = vpack.c.b16 %v989, %v985
    %v1022 = vpack.c.b16 %v990, %v986
    %v1023 = vpack.c.b16 %v991, %v987
    %v1024 = vpack.c.b16 %v992, %v988
    %1057 = vmatprep.subr.bf16.mxu0 %v994
    %1058 = vmatpush1.bf16.msra.mxu0 %v993
    %1059 = vmatprep.subr.bf16.mxu0 %v998
    %1060 = vmatpush1.bf16.msra.mxu0 %v997
    %1061 = vmatprep.subr.bf16.mxu0 %v1002
    %1062 = vmatpush1.bf16.msra.mxu0 %v1001
    %1063 = vmatprep.subr.bf16.mxu0 %v1006
    %1064 = vmatpush1.bf16.msra.mxu0 %v1005
    %1065 = vmatprep.subr.bf16.mxu0 %v1010
    %1066 = vmatpush1.bf16.msra.mxu0 %v1009
    %1067 = vmatprep.subr.bf16.mxu0 %v1014
    %1068 = vmatpush1.bf16.msra.mxu0 %v1013
    %1069 = vmatprep.subr.bf16.mxu0 %v1018
    %1070 = vmatpush1.bf16.msra.mxu0 %v1017
    %1071 = vmatprep.subr.bf16.mxu0 %v1022
    %1072 = vmatpush1.bf16.msra.mxu0 %v1021
    %1073 = vmatprep.subr.bf16.mxu0 0
    %1074 = vmatpush1.bf16.msra.mxu0 0
    %1075 = vmatprep.subr.bf16.mxu0 0
    %1076 = vmatpush1.bf16.msra.mxu0 0
    %1077 = vmatprep.subr.bf16.mxu0 0
    %1078 = vmatpush1.bf16.msra.mxu0 0
    %1079 = vmatprep.subr.bf16.mxu0 0
    %1080 = vmatpush1.bf16.msra.mxu0 0
    %1081 = vmatprep.subr.bf16.mxu0 0
    %1082 = vmatpush1.bf16.msra.mxu0 0
    %1083 = vmatprep.subr.bf16.mxu0 0
    %1084 = vmatpush1.bf16.msra.mxu0 0
    %1085 = vmatprep.subr.bf16.mxu0 0
    %1086 = vmatpush1.bf16.msra.mxu0 0
    %1087 = vmatprep.subr.bf16.mxu0 0
    %1088 = vmatpush1.bf16.msra.mxu0 0
    %1089 = vmatprep.mubr.bf16.mxu0 0
    %1090 = vmatmul.mubr.bf16.gmra.mrb[0].mxu0 %v895
    %v1091 = vpop.f32.mrb[0].mxu0
    %v1092 = vadd.f32 0.0, %v1091
    %v1093 = vpop.f32.mrb[0].mxu0
    %v1094 = vadd.f32 0.0, %v1093
    %v1095 = vpop.f32.mrb[0].mxu0
    %v1096 = vpop.f32.mrb[0].mxu0
    %1097 = vdwg.mxu0
    %1098 = vmatprep.subr.bf16.mxu0 %v996
    %1099 = vmatpush1.bf16.msra.mxu0 %v995
    %1100 = vmatprep.subr.bf16.mxu0 %v1000
    %1101 = vmatpush1.bf16.msra.mxu0 %v999
    %1102 = vmatprep.subr.bf16.mxu0 %v1004
    %1103 = vmatpush1.bf16.msra.mxu0 %v1003
    %1104 = vmatprep.subr.bf16.mxu0 %v1008
    %1105 = vmatpush1.bf16.msra.mxu0 %v1007
    %1106 = vmatprep.subr.bf16.mxu0 %v1012
    %1107 = vmatpush1.bf16.msra.mxu0 %v1011
    %1108 = vmatprep.subr.bf16.mxu0 %v1016
    %1109 = vmatpush1.bf16.msra.mxu0 %v1015
    %1110 = vmatprep.subr.bf16.mxu0 %v1020
    %1111 = vmatpush1.bf16.msra.mxu0 %v1019
    %1112 = vmatprep.subr.bf16.mxu0 %v1024
    %1113 = vmatpush1.bf16.msra.mxu0 %v1023
    %1114 = vmatprep.subr.bf16.mxu0 0
    %1115 = vmatpush1.bf16.msra.mxu0 0
    %1116 = vmatprep.subr.bf16.mxu0 0
    %1117 = vmatpush1.bf16.msra.mxu0 0
    %1118 = vmatprep.subr.bf16.mxu0 0
    %1119 = vmatpush1.bf16.msra.mxu0 0
    %1120 = vmatprep.subr.bf16.mxu0 0
    %1121 = vmatpush1.bf16.msra.mxu0 0
    %1122 = vmatprep.subr.bf16.mxu0 0
    %1123 = vmatpush1.bf16.msra.mxu0 0
    %1124 = vmatprep.subr.bf16.mxu0 0
    %1125 = vmatpush1.bf16.msra.mxu0 0
    %1126 = vmatprep.subr.bf16.mxu0 0
    %1127 = vmatpush1.bf16.msra.mxu0 0
    %1128 = vmatprep.subr.bf16.mxu0 0
    %1129 = vmatpush1.bf16.msra.mxu0 0
    %1130 = vmatprep.mubr.bf16.mxu0 0
    %1131 = vmatmul.mubr.bf16.gmra.mrb[0].mxu0 %v895
    %v1132 = vpop.f32.mrb[0].mxu0
    %v1133 = vadd.f32 0.0, %v1132
    %v1134 = vpop.f32.mrb[0].mxu0
    %v1135 = vadd.f32 0.0, %v1134
    %v1136 = vpop.f32.mrb[0].mxu0
    %v1137 = vpop.f32.mrb[0].mxu0
    %1138 = vdwg.mxu0
    %v1143 = vrot.slane %v1092, 4
    %v1144 = vrot.slane %v1094, 4
    %v1145 = vrot.slane %v1133, 4
    %v1146 = vrot.slane %v1135, 4
    %v1151 = vadd.f32 %v188, %v1143
    %v1152 = vadd.f32 %v190, %v1144
    %v1153 = vadd.f32 %v229, %v1145
    %v1154 = vadd.f32 %v231, %v1146
    %v1155 = vxor.u32 %v1151, 2147483648
    %v1156 = vmul.f32 %v1155, 1.442695
    %v1157 = vpow.pop %v1156
    %v1158 = vadd.f32 %v1157, 1.0
    %v1159 = vrcp.pop %v1158
    %v1160 = vmul.f32 1.0, %v1159
    %v1161 = vxor.u32 %v1152, 2147483648
    %v1162 = vmul.f32 %v1161, 1.442695
    %v1163 = vpow.pop %v1162
    %v1164 = vadd.f32 %v1163, 1.0
    %v1165 = vrcp.pop %v1164
    %v1166 = vmul.f32 1.0, %v1165
    %v1167 = vtanh.pop %v1153
    %v1168 = vxor.u32 %v1154, 2147483648
    %v1169 = vmul.f32 %v1168, 1.442695
    %v1170 = vpow.pop %v1169
    %v1171 = vadd.f32 %v1170, 1.0
    %v1172 = vrcp.pop %v1171
    %v1173 = vmul.f32 1.0, %v1172
    %v1175 = vrot.slane %v856, 6
    %v1177 = vmul.f32 %v1166, %v1175
    %v1178 = vmul.f32 %v1160, %v1167
    %v1179 = vadd.f32 %v1177, %v1178
    %v1180 = vtanh.pop %v1179
    %v1181 = vmul.f32 %v1173, %v1180
    %s1182 = scalar_lea.vmem %s6, 4
    %1183 = vst [vmem:[%s1182 - $0x4] sm:$0x30] %v1181
    %v1184 = vpack.c.bf16 %v1181, %v1181
    %v1185 = vld [vmem:[%s4] sm:$0xff]
    %v1186 = vld [vmem:[%s4 + $0x8] sm:$0xff]
    %v1187 = vld [vmem:[%s4 + $0x10] sm:$0xff]
    %v1188 = vld [vmem:[%s4 + $0x18] sm:$0xff]
    %v1189 = vld [vmem:[%s4 + $0x20] sm:$0xff]
    %v1190 = vld [vmem:[%s4 + $0x28] sm:$0xff]
    %v1191 = vld [vmem:[%s4 + $0x30] sm:$0xff]
    %v1192 = vld [vmem:[%s4 + $0x38] sm:$0xff]
    %v1193 = vld [vmem:[%s4 + $0x40] sm:$0xff]
    %v1194 = vld [vmem:[%s4 + $0x48] sm:$0xff]
    %v1195 = vld [vmem:[%s4 + $0x50] sm:$0xff]
    %v1196 = vld [vmem:[%s4 + $0x58] sm:$0xff]
    %v1197 = vld [vmem:[%s4 + $0x60] sm:$0xff]
    %v1198 = vld [vmem:[%s4 + $0x68] sm:$0xff]
    %v1199 = vld [vmem:[%s4 + $0x70] sm:$0xff]
    %v1200 = vld [vmem:[%s4 + $0x78] sm:$0xff]
    %v1201 = vld [vmem:[%s4 + $0x80] sm:$0xff]
    %v1202 = vld [vmem:[%s4 + $0x88] sm:$0xff]
    %v1203 = vld [vmem:[%s4 + $0x90] sm:$0xff]
    %v1204 = vld [vmem:[%s4 + $0x98] sm:$0xff]
    %v1205 = vld [vmem:[%s4 + $0xa0] sm:$0xff]
    %v1206 = vld [vmem:[%s4 + $0xa8] sm:$0xff]
    %v1207 = vld [vmem:[%s4 + $0xb0] sm:$0xff]
    %v1208 = vld [vmem:[%s4 + $0xb8] sm:$0xff]
    %v1209 = vld [vmem:[%s4 + $0xc0] sm:$0xff]
    %v1210 = vld [vmem:[%s4 + $0xc8] sm:$0xff]
    %v1211 = vld [vmem:[%s4 + $0xd0] sm:$0xff]
    %v1212 = vld [vmem:[%s4 + $0xd8] sm:$0xff]
    %v1213 = vld [vmem:[%s4 + $0xe0] sm:$0xff]
    %v1214 = vld [vmem:[%s4 + $0xe8] sm:$0xff]
    %v1215 = vld [vmem:[%s4 + $0xf0] sm:$0xff]
    %v1216 = vld [vmem:[%s4 + $0xf8] sm:$0xff]
    %v1218 = vrot.slane %v1184, 2
    %v1252 = vunpack.c.l.b16 %v1185
    %v1253 = vunpack.c.h.b16 %v1185
    %v1254 = vunpack.c.l.b16 %v1186
    %v1255 = vunpack.c.h.b16 %v1186
    %v1256 = vunpack.c.l.b16 %v1187
    %v1257 = vunpack.c.h.b16 %v1187
    %v1258 = vunpack.c.l.b16 %v1188
    %v1259 = vunpack.c.h.b16 %v1188
    %v1260 = vunpack.c.l.b16 %v1189
    %v1261 = vunpack.c.h.b16 %v1189
    %v1262 = vunpack.c.l.b16 %v1190
    %v1263 = vunpack.c.h.b16 %v1190
    %v1264 = vunpack.c.l.b16 %v1191
    %v1265 = vunpack.c.h.b16 %v1191
    %v1266 = vunpack.c.l.b16 %v1192
    %v1267 = vunpack.c.h.b16 %v1192
    %v1268 = vunpack.c.l.b16 %v1193
    %v1269 = vunpack.c.h.b16 %v1193
    %v1270 = vunpack.c.l.b16 %v1194
    %v1271 = vunpack.c.h.b16 %v1194
    %v1272 = vunpack.c.l.b16 %v1195
    %v1273 = vunpack.c.h.b16 %v1195
    %v1274 = vunpack.c.l.b16 %v1196
    %v1275 = vunpack.c.h.b16 %v1196
    %v1276 = vunpack.c.l.b16 %v1197
    %v1277 = vunpack.c.h.b16 %v1197
    %v1278 = vunpack.c.l.b16 %v1198
    %v1279 = vunpack.c.h.b16 %v1198
    %v1280 = vunpack.c.l.b16 %v1199
    %v1281 = vunpack.c.h.b16 %v1199
    %v1282 = vunpack.c.l.b16 %v1200
    %v1283 = vunpack.c.h.b16 %v1200
    %v1284 = vunpack.c.l.b16 %v1201
    %v1285 = vunpack.c.h.b16 %v1201
    %v1286 = vunpack.c.l.b16 %v1202
    %v1287 = vunpack.c.h.b16 %v1202
    %v1288 = vunpack.c.l.b16 %v1203
    %v1289 = vunpack.c.h.b16 %v1203
    %v1290 = vunpack.c.l.b16 %v1204
    %v1291 = vunpack.c.h.b16 %v1204
    %v1292 = vunpack.c.l.b16 %v1205
    %v1293 = vunpack.c.h.b16 %v1205
    %v1294 = vunpack.c.l.b16 %v1206
    %v1295 = vunpack.c.h.b16 %v1206
    %v1296 = vunpack.c.l.b16 %v1207
    %v1297 = vunpack.c.h.b16 %v1207
    %v1298 = vunpack.c.l.b16 %v1208
    %v1299 = vunpack.c.h.b16 %v1208
    %v1300 = vunpack.c.l.b16 %v1209
    %v1301 = vunpack.c.h.b16 %v1209
    %v1302 = vunpack.c.l.b16 %v1210
    %v1303 = vunpack.c.h.b16 %v1210
    %v1304 = vunpack.c.l.b16 %v1211
    %v1305 = vunpack.c.h.b16 %v1211
    %v1306 = vunpack.c.l.b16 %v1212
    %v1307 = vunpack.c.h.b16 %v1212
    %v1308 = vunpack.c.l.b16 %v1213
    %v1309 = vunpack.c.h.b16 %v1213
    %v1310 = vunpack.c.l.b16 %v1214
    %v1311 = vunpack.c.h.b16 %v1214
    %v1312 = vunpack.c.l.b16 %v1215
    %v1313 = vunpack.c.h.b16 %v1215
    %v1314 = vunpack.c.l.b16 %v1216
    %v1315 = vunpack.c.h.b16 %v1216
    %v1316 = vpack.c.b16 %v1256, %v1252
    %v1317 = vpack.c.b16 %v1257, %v1253
    %v1318 = vpack.c.b16 %v1258, %v1254
    %v1319 = vpack.c.b16 %v1259, %v1255
    %v1320 = vpack.c.b16 %v1264, %v1260
    %v1321 = vpack.c.b16 %v1265, %v1261
    %v1322 = vpack.c.b16 %v1266, %v1262
    %v1323 = vpack.c.b16 %v1267, %v1263
    %v1324 = vpack.c.b16 %v1272, %v1268
    %v1325 = vpack.c.b16 %v1273, %v1269
    %v1326 = vpack.c.b16 %v1274, %v1270
    %v1327 = vpack.c.b16 %v1275, %v1271
    %v1328 = vpack.c.b16 %v1280, %v1276
    %v1329 = vpack.c.b16 %v1281, %v1277
    %v1330 = vpack.c.b16 %v1282, %v1278
    %v1331 = vpack.c.b16 %v1283, %v1279
    %v1332 = vpack.c.b16 %v1288, %v1284
    %v1333 = vpack.c.b16 %v1289, %v1285
    %v1334 = vpack.c.b16 %v1290, %v1286
    %v1335 = vpack.c.b16 %v1291, %v1287
    %v1336 = vpack.c.b16 %v1296, %v1292
    %v1337 = vpack.c.b16 %v1297, %v1293
    %v1338 = vpack.c.b16 %v1298, %v1294
    %v1339 = vpack.c.b16 %v1299, %v1295
    %v1340 = vpack.c.b16 %v1304, %v1300
    %v1341 = vpack.c.b16 %v1305, %v1301
    %v1342 = vpack.c.b16 %v1306, %v1302
    %v1343 = vpack.c.b16 %v1307, %v1303
    %v1344 = vpack.c.b16 %v1312, %v1308
    %v1345 = vpack.c.b16 %v1313, %v1309
    %v1346 = vpack.c.b16 %v1314, %v1310
    %v1347 = vpack.c.b16 %v1315, %v1311
    %1380 = vmatprep.subr.bf16.mxu0 %v1317
    %1381 = vmatpush1.bf16.msra.mxu0 %v1316
    %1382 = vmatprep.subr.bf16.mxu0 %v1321
    %1383 = vmatpush1.bf16.msra.mxu0 %v1320
    %1384 = vmatprep.subr.bf16.mxu0 %v1325
    %1385 = vmatpush1.bf16.msra.mxu0 %v1324
    %1386 = vmatprep.subr.bf16.mxu0 %v1329
    %1387 = vmatpush1.bf16.msra.mxu0 %v1328
    %1388 = vmatprep.subr.bf16.mxu0 %v1333
    %1389 = vmatpush1.bf16.msra.mxu0 %v1332
    %1390 = vmatprep.subr.bf16.mxu0 %v1337
    %1391 = vmatpush1.bf16.msra.mxu0 %v1336
    %1392 = vmatprep.subr.bf16.mxu0 %v1341
    %1393 = vmatpush1.bf16.msra.mxu0 %v1340
    %1394 = vmatprep.subr.bf16.mxu0 %v1345
    %1395 = vmatpush1.bf16.msra.mxu0 %v1344
    %1396 = vmatprep.subr.bf16.mxu0 0
    %1397 = vmatpush1.bf16.msra.mxu0 0
    %1398 = vmatprep.subr.bf16.mxu0 0
    %1399 = vmatpush1.bf16.msra.mxu0 0
    %1400 = vmatprep.subr.bf16.mxu0 0
    %1401 = vmatpush1.bf16.msra.mxu0 0
    %1402 = vmatprep.subr.bf16.mxu0 0
    %1403 = vmatpush1.bf16.msra.mxu0 0
    %1404 = vmatprep.subr.bf16.mxu0 0
    %1405 = vmatpush1.bf16.msra.mxu0 0
    %1406 = vmatprep.subr.bf16.mxu0 0
    %1407 = vmatpush1.bf16.msra.mxu0 0
    %1408 = vmatprep.subr.bf16.mxu0 0
    %1409 = vmatpush1.bf16.msra.mxu0 0
    %1410 = vmatprep.subr.bf16.mxu0 0
    %1411 = vmatpush1.bf16.msra.mxu0 0
    %1412 = vmatprep.mubr.bf16.mxu0 0
    %1413 = vmatmul.mubr.bf16.gmra.mrb[0].mxu0 %v1218
    %v1414 = vpop.f32.mrb[0].mxu0
    %v1415 = vadd.f32 0.0, %v1414
    %v1416 = vpop.f32.mrb[0].mxu0
    %v1417 = vadd.f32 0.0, %v1416
    %v1418 = vpop.f32.mrb[0].mxu0
    %v1419 = vpop.f32.mrb[0].mxu0
    %1420 = vdwg.mxu0
    %1421 = vmatprep.subr.bf16.mxu0 %v1319
    %1422 = vmatpush1.bf16.msra.mxu0 %v1318
    %1423 = vmatprep.subr.bf16.mxu0 %v1323
    %1424 = vmatpush1.bf16.msra.mxu0 %v1322
    %1425 = vmatprep.subr.bf16.mxu0 %v1327
    %1426 = vmatpush1.bf16.msra.mxu0 %v1326
    %1427 = vmatprep.subr.bf16.mxu0 %v1331
    %1428 = vmatpush1.bf16.msra.mxu0 %v1330
    %1429 = vmatprep.subr.bf16.mxu0 %v1335
    %1430 = vmatpush1.bf16.msra.mxu0 %v1334
    %1431 = vmatprep.subr.bf16.mxu0 %v1339
    %1432 = vmatpush1.bf16.msra.mxu0 %v1338
    %1433 = vmatprep.subr.bf16.mxu0 %v1343
    %1434 = vmatpush1.bf16.msra.mxu0 %v1342
    %1435 = vmatprep.subr.bf16.mxu0 %v1347
    %1436 = vmatpush1.bf16.msra.mxu0 %v1346
    %1437 = vmatprep.subr.bf16.mxu0 0
    %1438 = vmatpush1.bf16.msra.mxu0 0
    %1439 = vmatprep.subr.bf16.mxu0 0
    %1440 = vmatpush1.bf16.msra.mxu0 0
    %1441 = vmatprep.subr.bf16.mxu0 0
    %1442 = vmatpush1.bf16.msra.mxu0 0
    %1443 = vmatprep.subr.bf16.mxu0 0
    %1444 = vmatpush1.bf16.msra.mxu0 0
    %1445 = vmatprep.subr.bf16.mxu0 0
    %1446 = vmatpush1.bf16.msra.mxu0 0
    %1447 = vmatprep.subr.bf16.mxu0 0
    %1448 = vmatpush1.bf16.msra.mxu0 0
    %1449 = vmatprep.subr.bf16.mxu0 0
    %1450 = vmatpush1.bf16.msra.mxu0 0
    %1451 = vmatprep.subr.bf16.mxu0 0
    %1452 = vmatpush1.bf16.msra.mxu0 0
    %1453 = vmatprep.mubr.bf16.mxu0 0
    %1454 = vmatmul.mubr.bf16.gmra.mrb[0].mxu0 %v1218
    %v1455 = vpop.f32.mrb[0].mxu0
    %v1456 = vadd.f32 0.0, %v1455
    %v1457 = vpop.f32.mrb[0].mxu0
    %v1458 = vadd.f32 0.0, %v1457
    %v1459 = vpop.f32.mrb[0].mxu0
    %v1460 = vpop.f32.mrb[0].mxu0
    %1461 = vdwg.mxu0
    %v1466 = vrot.slane %v1415, 2
    %v1467 = vrot.slane %v1417, 2
    %v1468 = vrot.slane %v1456, 2
    %v1469 = vrot.slane %v1458, 2
    %v1474 = vadd.f32 %v188, %v1466
    %v1475 = vadd.f32 %v190, %v1467
    %v1476 = vadd.f32 %v229, %v1468
    %v1477 = vadd.f32 %v231, %v1469
    %v1478 = vxor.u32 %v1474, 2147483648
    %v1479 = vmul.f32 %v1478, 1.442695
    %v1480 = vpow.pop %v1479
    %v1481 = vadd.f32 %v1480, 1.0
    %v1482 = vrcp.pop %v1481
    %v1483 = vmul.f32 1.0, %v1482
    %v1484 = vxor.u32 %v1475, 2147483648
    %v1485 = vmul.f32 %v1484, 1.442695
    %v1486 = vpow.pop %v1485
    %v1487 = vadd.f32 %v1486, 1.0
    %v1488 = vrcp.pop %v1487
    %v1489 = vmul.f32 1.0, %v1488
    %v1490 = vtanh.pop %v1476
    %v1491 = vxor.u32 %v1477, 2147483648
    %v1492 = vmul.f32 %v1491, 1.442695
    %v1493 = vpow.pop %v1492
    %v1494 = vadd.f32 %v1493, 1.0
    %v1495 = vrcp.pop %v1494
    %v1496 = vmul.f32 1.0, %v1495
    %v1498 = vrot.slane %v1179, 6
    %v1500 = vmul.f32 %v1489, %v1498
    %v1501 = vmul.f32 %v1483, %v1490
    %v1502 = vadd.f32 %v1500, %v1501
    %v1503 = vtanh.pop %v1502
    %v1504 = vmul.f32 %v1496, %v1503
    %s1505 = scalar_lea.vmem %s6, 6
    %1506 = vst [vmem:[%s1505 - $0x6] sm:$0xc0] %v1504
    %1507 = vst [vmem:[#allocation2 - $0x6] sm:$0xc0] %v1504
    %1508 = vst [vmem:[#allocation4 - $0x6] sm:$0xc0] %v1502
    // Predicated region
    $region26: #{decoder_forward.2} parent=1 // pred_check
      _
    $region27: #{decoder_forward.2} parent=1 // pred_check_branch
      %1510 = sbr.rel (0) target = $region29
    $region28: #{decoder_forward.2} parent=1 // pred_region
      _
    $region29: #{decoder_forward.2} parent=1 // pred_fallthru
      _
    // Predicated region
    $region30: #{decoder_forward.2} parent=1 // pred_check
      _
    $region31: #{decoder_forward.2} parent=1 // pred_check_branch
      %1512 = sbr.rel (0) target = $region33
    $region32: #{decoder_forward.2} parent=1 // pred_region
      %s1514 = ssub.s32 32, 32
      %1515 = vsyncadd [#allocation3], %s1514
      %s1517 = sshll.u32 [#allocation2], 4
      %s1518 = int_to_ptr.vmem [resolvable:$true] %s1517
      %1520 = dma.vmem_to_hbm [thread:$0]  %s1518, 32, %s7, [#allocation3]
    $region33: #{decoder_forward.2} parent=1 // pred_fallthru
      _
    // Predicated region
    $region34: #{decoder_forward.2} parent=1 // pred_check
      _
    $region35: #{decoder_forward.2} parent=1 // pred_check_branch
      %1522 = sbr.rel (0) target = $region37
    $region36: #{decoder_forward.2} parent=1 // pred_region
      %s1524 = ssub.s32 32, 32
      %1525 = vsyncadd [#allocation5], %s1524
      %s1527 = sshll.u32 [#allocation4], 4
      %s1528 = int_to_ptr.vmem [resolvable:$true] %s1527
      %1530 = dma.vmem_to_hbm [thread:$0]  %s1528, 32, %s8, [#allocation5]
    $region37: #{decoder_forward.2} parent=1 // pred_fallthru
      _
    // Predicated region
    $region38: #{decoder_forward.2} parent=1 // pred_check
      _
    $region39: #{decoder_forward.2} parent=1 // pred_check_branch
      %1532 = sbr.rel (0) target = $region41
    $region40: #{decoder_forward.2} parent=1 // pred_region
      _
    $region41: #{decoder_forward.2} parent=1 // pred_fallthru
      _
    // Predicated region
    $region42: #{decoder_forward.2} parent=1 // pred_check
      _
    $region43: #{decoder_forward.2} parent=1 // pred_check_branch
      %1534 = sbr.rel (0) target = $region45
    $region44: #{decoder_forward.2} parent=1 // pred_region
      %1535 = dma.done [#allocation3], 32
    $region45: #{decoder_forward.2} parent=1 // pred_fallthru
      _
    // Predicated region
    $region46: #{decoder_forward.2} parent=1 // pred_check
      _
    $region47: #{decoder_forward.2} parent=1 // pred_check_branch
      %1537 = sbr.rel (0) target = $region49
    $region48: #{decoder_forward.2} parent=1 // pred_region
      %1538 = dma.done [#allocation5], 32
    $region49: #{decoder_forward.2} parent=1 // pred_fallthru
      _
    %1539 = vsyncpa [#allocation3], 1
    %1540 = vsyncpa [#allocation5], 1

</llo_original>
